<compile_context>
chip_gen: v7x
topology: tpu7x:2x2x1
jax: 0.10.0
libtpu: 0.0.40
codegen_flags: <defaults>
</compile_context>

<pallas_src>
import functools

import jax
import jax.numpy as jnp
from jax.experimental import pallas as pl
from jax.experimental.pallas import tpu as pltpu

_SUBLANE = 8


# ----------------------------------------------------------------------------
# In-kernel helpers (activations are lane-dense (C, N*H*W), batch folded)
# ----------------------------------------------------------------------------
def _shift(x, d, ptot):
    """out[:, p] = x[:, (p + d) mod Ptot] (circular); caller masks invalid taps."""
    if d == 0:
        return x
    return pltpu.roll(x, shift=(-d) % ptot, axis=1)


def _conv3x3(h, w_ref, b_ref, mask_ref, W, relu):
    """3x3 SAME conv + bias (+ReLU) as one bf16 im2col MXU matmul.

    h:        (Cin, Ptot) f32 activation, batch folded along lanes.
    w_ref:    (Cout, 9*Cin) bf16 weights, columns ordered (dy, dx, cin).
    b_ref:    (Cout, 1) f32 bias (epilogue broadcast add).
    mask_ref: (9, Ptot) f32 validity masks (SAME zero padding + per-image
              boundaries), rows in the same (dy, dx) order as the weights.
    """
    _, ptot = h.shape
    mask = mask_ref[...]                      # hoisted: one load per conv
    blocks = []
    k = 0
    for dy in (-1, 0, 1):
        for dx in (-1, 0, 1):
            d = dy * W + dx
            s = _shift(h, d, ptot)
            if d != 0:
                s = s * mask[k:k + 1, :]      # zero the out-of-image taps
            blocks.append(s)
            k += 1
    # f32 concat of sublane-aligned blocks, single cast to bf16 for the MXU.
    patches = jnp.concatenate(blocks, axis=0).astype(jnp.bfloat16)
    y = jnp.dot(w_ref[...], patches, preferred_element_type=jnp.float32)
    y = y + b_ref[...]
    if relu:
        y = jnp.maximum(y, 0.0)
    return y


def _maxpool2x2(h, W, sel_ref):
    """2x2 / stride-2 max pool: two shift-maxes + one precomputed 0/1 selection
    matmul.  Circularly wrapped taps never reach a selected (even, even) corner,
    so no masks are needed here."""
    _, ptot = h.shape
    m = jnp.maximum(h, _shift(h, 1, ptot))    # horizontal pair max
    m = jnp.maximum(m, _shift(m, W, ptot))    # vertical pair max
    return jnp.dot(m.astype(jnp.bfloat16), sel_ref[...],
                   preferred_element_type=jnp.float32)


def _upsample2x(h, sel_ref):
    """Nearest-neighbour 2x upsample: one precomputed 0/1 selection matmul."""
    return jnp.dot(h.astype(jnp.bfloat16), sel_ref[...],
                   preferred_element_type=jnp.float32)


# ----------------------------------------------------------------------------
# The fused UNet kernel: whole batch, whole network, one invocation
# ----------------------------------------------------------------------------
def _unet_kernel(x_ref,
                 we1, be1, we2, be2, we3, be3, we4, be4,
                 wd1, bd1, wd2, bd2, wd3, bd3,
                 mask_f, mask_h, pool1, pool2, up1, up2,
                 o_ref, *, W):
    W2 = W // 2
    h = x_ref[...]                                       # (Cin_pad, N*H*W) f32
    # ---------------- encoder ----------------
    h = _conv3x3(h, we1, be1, mask_f, W, relu=True)
    h = _conv3x3(h, we2, be2, mask_f, W, relu=True)
    h = _maxpool2x2(h, W, pool1)                         # (c1, N*H*W/4)
    h = _conv3x3(h, we3, be3, mask_h, W2, relu=True)
    h = _conv3x3(h, we4, be4, mask_h, W2, relu=True)
    feats = _maxpool2x2(h, W2, pool2)                    # encoder features
    # ---------------- decoder ----------------
    h = _upsample2x(feats, up1)
    h = _conv3x3(h, wd1, bd1, mask_h, W2, relu=True)
    h = _upsample2x(h, up2)
    h = _conv3x3(h, wd2, bd2, mask_f, W, relu=True)
    h = _conv3x3(h, wd3, bd3, mask_f, W, relu=False)     # final: no activation
    o_ref[...] = h.astype(o_ref.dtype)


# ----------------------------------------------------------------------------
# Host-side precomputed constants (depend only on N, H, W)
# ----------------------------------------------------------------------------
def _shift_masks(N, H, W):
    """(9, N*H*W) f32 validity masks for the 9 conv taps (dy, dx) row-major."""
    P = H * W
    p = jnp.arange(N * P, dtype=jnp.int32) % P
    y, x = p // W, p % W
    rows = []
    for dy in (-1, 0, 1):
        for dx in (-1, 0, 1):
            ok = (y + dy >= 0) & (y + dy < H) & (x + dx >= 0) & (x + dx < W)
            rows.append(ok.astype(jnp.float32))
    return jnp.stack(rows, axis=0)


def _pool_sel(N, H, W):
    """(N*H*W, N*(H/2)*(W/2)) bf16 one-hot selecting the (even, even) corners."""
    P, Hc, Wc = H * W, H // 2, W // 2
    Pc = Hc * Wc
    j = jnp.arange(N * Pc, dtype=jnp.int32)
    n, jj = j // Pc, j % Pc
    src = n * P + (2 * (jj // Wc)) * W + 2 * (jj % Wc)
    i = jnp.arange(N * P, dtype=jnp.int32)
    return (i[:, None] == src[None, :]).astype(jnp.bfloat16)


def _up_sel(N, Hc, Wc):
    """(N*Hc*Wc, N*(2Hc)*(2Wc)) bf16 one-hot for nearest-neighbour 2x upsample."""
    Pc, H, W = Hc * Wc, 2 * Hc, 2 * Wc
    P = H * W
    j = jnp.arange(N * P, dtype=jnp.int32)
    n, jj = j // P, j % P
    src = n * Pc + (jj // W // 2) * Wc + (jj % W) // 2
    i = jnp.arange(N * Pc, dtype=jnp.int32)
    return (i[:, None] == src[None, :]).astype(jnp.bfloat16)


def _prep_weight(w_hwio, b, cin_pad=0, cout_pad=0):
    """HWIO (3,3,Cin,Cout)+(Cout,) -> bf16 (Cout,9*Cin), f32 (Cout,1) bias."""
    if cin_pad:
        w_hwio = jnp.pad(w_hwio, ((0, 0), (0, 0), (0, cin_pad), (0, 0)))
    if cout_pad:
        w_hwio = jnp.pad(w_hwio, ((0, 0), (0, 0), (0, 0), (0, cout_pad)))
        b = jnp.pad(b, ((0, cout_pad),))
    cout = w_hwio.shape[-1]
    wm = jnp.transpose(w_hwio, (3, 0, 1, 2)).reshape(cout, -1)
    return wm.astype(jnp.bfloat16), b.astype(jnp.float32)[:, None]


# ----------------------------------------------------------------------------
# Host-side wrapper
# ----------------------------------------------------------------------------
@jax.jit
def unet_forward(x_nchw, params):
    """forward(x) = decoder(encoder(x)); NCHW in, NCHW out; one pallas_call."""
    N, C_in, H, W = x_nchw.shape
    assert H % 4 == 0 and W % 4 == 0

    cin_pad = (-C_in) % _SUBLANE
    c_out = params["d3"][0].shape[-1]
    cout_pad = (-c_out) % _SUBLANE

    w_e1, b_e1 = _prep_weight(*params["e1"], cin_pad=cin_pad)
    w_e2, b_e2 = _prep_weight(*params["e2"])
    w_e3, b_e3 = _prep_weight(*params["e3"])
    w_e4, b_e4 = _prep_weight(*params["e4"])
    w_d1, b_d1 = _prep_weight(*params["d1"])
    w_d2, b_d2 = _prep_weight(*params["d2"])
    w_d3, b_d3 = _prep_weight(*params["d3"], cout_pad=cout_pad)

    # Fold batch along the lane axis: (N, C, H, W) -> (C_pad, N*H*W).
    xp = jnp.pad(x_nchw, ((0, 0), (0, cin_pad), (0, 0), (0, 0)))
    x_flat = jnp.transpose(xp, (1, 0, 2, 3)).reshape(C_in + cin_pad, N * H * W)
    x_flat = x_flat.astype(jnp.float32)

    mask_f = _shift_masks(N, H, W)
    mask_h = _shift_masks(N, H // 2, W // 2)
    pool1 = _pool_sel(N, H, W)
    pool2 = _pool_sel(N, H // 2, W // 2)
    up1 = _up_sel(N, H // 4, W // 4)
    up2 = _up_sel(N, H // 2, W // 2)

    out_flat = pl.pallas_call(
        functools.partial(_unet_kernel, W=W),
        out_shape=jax.ShapeDtypeStruct((c_out + cout_pad, N * H * W),
                                       jnp.float32),
        compiler_params=pltpu.CompilerParams(
            vmem_limit_bytes=32 * 1024 * 1024),
    )(x_flat,
      w_e1, b_e1, w_e2, b_e2, w_e3, b_e3, w_e4, b_e4,
      w_d1, b_d1, w_d2, b_d2, w_d3, b_d3,
      mask_f, mask_h, pool1, pool2, up1, up2)

    out = out_flat.reshape(c_out + cout_pad, N, H, W)
    return jnp.transpose(out, (1, 0, 2, 3))[:, :c_out]


# ----------------------------------------------------------------------------
# Parameters (deterministic init)
# ----------------------------------------------------------------------------
def init_params(key, c_in=4, c1=8, c2=16):
    def conv_p(k, cin, cout):
        kw, kb = jax.random.split(k)
        fan_in = 9 * cin
        w = jax.random.normal(kw, (3, 3, cin, cout), jnp.float32) * (2.0 / fan_in) ** 0.5
        b = 0.01 * jax.random.normal(kb, (cout,), jnp.float32)
        return w, b

    keys = jax.random.split(key, 7)
    return {
        "e1": conv_p(keys[0], c_in, c1),
        "e2": conv_p(keys[1], c1, c1),
        "e3": conv_p(keys[2], c1, c2),
        "e4": conv_p(keys[3], c2, c2),
        "d1": conv_p(keys[4], c2, c1),
        "d2": conv_p(keys[5], c1, c1),
        "d3": conv_p(keys[6], c1, c_in),
    }


# ----------------------------------------------------------------------------
# Pure-JAX f32 reference of the same network (for correctness checking)
# ----------------------------------------------------------------------------
def _conv3x3_ref(x, w, b, relu=True):
    y = jax.lax.conv_general_dilated(
        x, w, window_strides=(1, 1), padding="SAME",
        dimension_numbers=("NHWC", "HWIO", "NHWC"))
    y = y + b
    return jnp.maximum(y, 0.0) if relu else y


def _maxpool_ref(x):
    N, H, W, C = x.shape
    return x.reshape(N, H // 2, 2, W // 2, 2, C).max(axis=(2, 4))


def _upsample_ref(x):
    return jnp.repeat(jnp.repeat(x, 2, axis=1), 2, axis=2)


def unet_forward_ref(x_nchw, params):
    x = jnp.transpose(x_nchw, (0, 2, 3, 1))        # NCHW -> NHWC
    x = _conv3x3_ref(x, *params["e1"])
    x = _conv3x3_ref(x, *params["e2"])
    x = _maxpool_ref(x)
    x = _conv3x3_ref(x, *params["e3"])
    x = _conv3x3_ref(x, *params["e4"])
    x = _maxpool_ref(x)
    x = _upsample_ref(x)
    x = _conv3x3_ref(x, *params["d1"])
    x = _upsample_ref(x)
    x = _conv3x3_ref(x, *params["d2"])
    x = _conv3x3_ref(x, *params["d3"], relu=False)
    return jnp.transpose(x, (0, 3, 1, 2))          # NHWC -> NCHW


if __name__ == "__main__":
    key = jax.random.PRNGKey(0)
    kx, kp = jax.random.split(key)

    # Small shapes consistent with the module: batch=2, channels=4, spatial=16.
    x = jax.random.normal(kx, (2, 4, 16, 16), jnp.float32)   # NCHW, like PyTorch
    params = init_params(kp)

    out = unet_forward(x, params)
    out = jax.block_until_ready(out)

    ref = unet_forward_ref(x, params)
    assert out.shape == (2, 4, 16, 16), out.shape
    # bf16 MXU operands with f32 accumulation across the 7-layer fused network:
    # tolerance loosened vs. the f32 reference (structural bugs give O(1) errors).
    assert jnp.allclose(out, ref, atol=5e-2, rtol=5e-2), (
        "mismatch vs reference, max abs err = "
        f"{float(jnp.max(jnp.abs(out - ref)))}")
    print("KERNEL_OK")
</pallas_src>

<mosaic_0001>
module attributes {stable_mosaic.version = 11 : i64} {
  func.func @_unet_kernel(%arg0: memref<8x512xf32, #tpu.memory_space<vmem>>, %arg1: memref<8x72xbf16, #tpu.memory_space<vmem>>, %arg2: memref<8x1xf32, #tpu.memory_space<vmem>>, %arg3: memref<8x72xbf16, #tpu.memory_space<vmem>>, %arg4: memref<8x1xf32, #tpu.memory_space<vmem>>, %arg5: memref<16x72xbf16, #tpu.memory_space<vmem>>, %arg6: memref<16x1xf32, #tpu.memory_space<vmem>>, %arg7: memref<16x144xbf16, #tpu.memory_space<vmem>>, %arg8: memref<16x1xf32, #tpu.memory_space<vmem>>, %arg9: memref<8x144xbf16, #tpu.memory_space<vmem>>, %arg10: memref<8x1xf32, #tpu.memory_space<vmem>>, %arg11: memref<8x72xbf16, #tpu.memory_space<vmem>>, %arg12: memref<8x1xf32, #tpu.memory_space<vmem>>, %arg13: memref<8x72xbf16, #tpu.memory_space<vmem>>, %arg14: memref<8x1xf32, #tpu.memory_space<vmem>>, %arg15: memref<9x512xf32, #tpu.memory_space<vmem>>, %arg16: memref<9x128xf32, #tpu.memory_space<vmem>>, %arg17: memref<512x128xbf16, #tpu.memory_space<vmem>>, %arg18: memref<128x32xbf16, #tpu.memory_space<vmem>>, %arg19: memref<32x128xbf16, #tpu.memory_space<vmem>>, %arg20: memref<128x512xbf16, #tpu.memory_space<vmem>>, %arg21: memref<8x512xf32, #tpu.memory_space<vmem>>) attributes {dimension_semantics = [], scalar_prefetch = 0 : i64, scratch_operands = 0 : i64, tpu.core_type = #tpu.core_type<tc>} {
    %c0 = arith.constant 0 : index
    %c0_0 = arith.constant 0 : index
    %0 = vector.load %arg0[%c0, %c0_0] : memref<8x512xf32, #tpu.memory_space<vmem>>, vector<8x512xf32>
    %c0_1 = arith.constant 0 : index
    %c0_2 = arith.constant 0 : index
    %1 = vector.load %arg15[%c0_1, %c0_2] : memref<9x512xf32, #tpu.memory_space<vmem>>, vector<9x512xf32>
    %c17_i32 = arith.constant 17 : i32
    %2 = tpu.dynamic_rotate %0 by %c17_i32 dim 1 : vector<8x512xf32>, i32 -> vector<8x512xf32>
    %3 = vector.extract_strided_slice %1 {offsets = [0, 0], sizes = [1, 512], strides = [1, 1]} : vector<9x512xf32> to vector<1x512xf32>
    %4 = vector.broadcast %3 : vector<1x512xf32> to vector<8x512xf32>
    %5 = arith.mulf %2, %4 : vector<8x512xf32>
    %c16_i32 = arith.constant 16 : i32
    %6 = tpu.dynamic_rotate %0 by %c16_i32 dim 1 : vector<8x512xf32>, i32 -> vector<8x512xf32>
    %7 = vector.extract_strided_slice %1 {offsets = [1, 0], sizes = [1, 512], strides = [1, 1]} : vector<9x512xf32> to vector<1x512xf32>
    %8 = vector.broadcast %7 : vector<1x512xf32> to vector<8x512xf32>
    %9 = arith.mulf %6, %8 : vector<8x512xf32>
    %c15_i32 = arith.constant 15 : i32
    %10 = tpu.dynamic_rotate %0 by %c15_i32 dim 1 : vector<8x512xf32>, i32 -> vector<8x512xf32>
    %11 = vector.extract_strided_slice %1 {offsets = [2, 0], sizes = [1, 512], strides = [1, 1]} : vector<9x512xf32> to vector<1x512xf32>
    %12 = vector.broadcast %11 : vector<1x512xf32> to vector<8x512xf32>
    %13 = arith.mulf %10, %12 : vector<8x512xf32>
    %c1_i32 = arith.constant 1 : i32
    %14 = tpu.dynamic_rotate %0 by %c1_i32 dim 1 : vector<8x512xf32>, i32 -> vector<8x512xf32>
    %15 = vector.extract_strided_slice %1 {offsets = [3, 0], sizes = [1, 512], strides = [1, 1]} : vector<9x512xf32> to vector<1x512xf32>
    %16 = vector.broadcast %15 : vector<1x512xf32> to vector<8x512xf32>
    %17 = arith.mulf %14, %16 : vector<8x512xf32>
    %c511_i32 = arith.constant 511 : i32
    %18 = tpu.dynamic_rotate %0 by %c511_i32 dim 1 : vector<8x512xf32>, i32 -> vector<8x512xf32>
    %19 = vector.extract_strided_slice %1 {offsets = [5, 0], sizes = [1, 512], strides = [1, 1]} : vector<9x512xf32> to vector<1x512xf32>
    %20 = vector.broadcast %19 : vector<1x512xf32> to vector<8x512xf32>
    %21 = arith.mulf %18, %20 : vector<8x512xf32>
    %c497_i32 = arith.constant 497 : i32
    %22 = tpu.dynamic_rotate %0 by %c497_i32 dim 1 : vector<8x512xf32>, i32 -> vector<8x512xf32>
    %23 = vector.extract_strided_slice %1 {offsets = [6, 0], sizes = [1, 512], strides = [1, 1]} : vector<9x512xf32> to vector<1x512xf32>
    %24 = vector.broadcast %23 : vector<1x512xf32> to vector<8x512xf32>
    %25 = arith.mulf %22, %24 : vector<8x512xf32>
    %c496_i32 = arith.constant 496 : i32
    %26 = tpu.dynamic_rotate %0 by %c496_i32 dim 1 : vector<8x512xf32>, i32 -> vector<8x512xf32>
    %27 = vector.extract_strided_slice %1 {offsets = [7, 0], sizes = [1, 512], strides = [1, 1]} : vector<9x512xf32> to vector<1x512xf32>
    %28 = vector.broadcast %27 : vector<1x512xf32> to vector<8x512xf32>
    %29 = arith.mulf %26, %28 : vector<8x512xf32>
    %c495_i32 = arith.constant 495 : i32
    %30 = tpu.dynamic_rotate %0 by %c495_i32 dim 1 : vector<8x512xf32>, i32 -> vector<8x512xf32>
    %31 = vector.extract_strided_slice %1 {offsets = [8, 0], sizes = [1, 512], strides = [1, 1]} : vector<9x512xf32> to vector<1x512xf32>
    %32 = vector.broadcast %31 : vector<1x512xf32> to vector<8x512xf32>
    %33 = arith.mulf %30, %32 : vector<8x512xf32>
    %34 = tpu.concatenate %5, %9, %13, %17, %0, %21, %25, %29, %33 in 0 : vector<8x512xf32>, vector<8x512xf32>, vector<8x512xf32>, vector<8x512xf32>, vector<8x512xf32>, vector<8x512xf32>, vector<8x512xf32>, vector<8x512xf32>, vector<8x512xf32> -> vector<72x512xf32>
    %35 = arith.truncf %34 : vector<72x512xf32> to vector<72x512xbf16>
    %c0_3 = arith.constant 0 : index
    %c0_4 = arith.constant 0 : index
    %36 = vector.load %arg1[%c0_3, %c0_4] : memref<8x72xbf16, #tpu.memory_space<vmem>>, vector<8x72xbf16>
    %cst = arith.constant dense<0.000000e+00> : vector<8x512xf32>
    %37 = tpu.matmul %36, %35, %cst {dimension_numbers = #tpu.dot_dimension_numbers<[1], [0], [0], [1], [0, 0, 1, 1], [], []>} : vector<8x72xbf16>, vector<72x512xbf16>, vector<8x512xf32> -> vector<8x512xf32>
    %c0_5 = arith.constant 0 : index
    %c0_6 = arith.constant 0 : index
    %38 = vector.load %arg2[%c0_5, %c0_6] : memref<8x1xf32, #tpu.memory_space<vmem>>, vector<8x1xf32>
    %39 = vector.broadcast %38 : vector<8x1xf32> to vector<8x512xf32>
    %40 = arith.addf %37, %39 : vector<8x512xf32>
    %cst_7 = arith.constant 0.000000e+00 : f32
    %41 = vector.broadcast %cst_7 : f32 to vector<8x512xf32>
    %42 = arith.maximumf %40, %41 : vector<8x512xf32>
    %c0_8 = arith.constant 0 : index
    %c0_9 = arith.constant 0 : index
    %43 = vector.load %arg15[%c0_8, %c0_9] : memref<9x512xf32, #tpu.memory_space<vmem>>, vector<9x512xf32>
    %c17_i32_10 = arith.constant 17 : i32
    %44 = tpu.dynamic_rotate %42 by %c17_i32_10 dim 1 : vector<8x512xf32>, i32 -> vector<8x512xf32>
    %45 = vector.extract_strided_slice %43 {offsets = [0, 0], sizes = [1, 512], strides = [1, 1]} : vector<9x512xf32> to vector<1x512xf32>
    %46 = vector.broadcast %45 : vector<1x512xf32> to vector<8x512xf32>
    %47 = arith.mulf %44, %46 : vector<8x512xf32>
    %c16_i32_11 = arith.constant 16 : i32
    %48 = tpu.dynamic_rotate %42 by %c16_i32_11 dim 1 : vector<8x512xf32>, i32 -> vector<8x512xf32>
    %49 = vector.extract_strided_slice %43 {offsets = [1, 0], sizes = [1, 512], strides = [1, 1]} : vector<9x512xf32> to vector<1x512xf32>
    %50 = vector.broadcast %49 : vector<1x512xf32> to vector<8x512xf32>
    %51 = arith.mulf %48, %50 : vector<8x512xf32>
    %c15_i32_12 = arith.constant 15 : i32
    %52 = tpu.dynamic_rotate %42 by %c15_i32_12 dim 1 : vector<8x512xf32>, i32 -> vector<8x512xf32>
    %53 = vector.extract_strided_slice %43 {offsets = [2, 0], sizes = [1, 512], strides = [1, 1]} : vector<9x512xf32> to vector<1x512xf32>
    %54 = vector.broadcast %53 : vector<1x512xf32> to vector<8x512xf32>
    %55 = arith.mulf %52, %54 : vector<8x512xf32>
    %c1_i32_13 = arith.constant 1 : i32
    %56 = tpu.dynamic_rotate %42 by %c1_i32_13 dim 1 : vector<8x512xf32>, i32 -> vector<8x512xf32>
    %57 = vector.extract_strided_slice %43 {offsets = [3, 0], sizes = [1, 512], strides = [1, 1]} : vector<9x512xf32> to vector<1x512xf32>
    %58 = vector.broadcast %57 : vector<1x512xf32> to vector<8x512xf32>
    %59 = arith.mulf %56, %58 : vector<8x512xf32>
    %c511_i32_14 = arith.constant 511 : i32
    %60 = tpu.dynamic_rotate %42 by %c511_i32_14 dim 1 : vector<8x512xf32>, i32 -> vector<8x512xf32>
    %61 = vector.extract_strided_slice %43 {offsets = [5, 0], sizes = [1, 512], strides = [1, 1]} : vector<9x512xf32> to vector<1x512xf32>
    %62 = vector.broadcast %61 : vector<1x512xf32> to vector<8x512xf32>
    %63 = arith.mulf %60, %62 : vector<8x512xf32>
    %c497_i32_15 = arith.constant 497 : i32
    %64 = tpu.dynamic_rotate %42 by %c497_i32_15 dim 1 : vector<8x512xf32>, i32 -> vector<8x512xf32>
    %65 = vector.extract_strided_slice %43 {offsets = [6, 0], sizes = [1, 512], strides = [1, 1]} : vector<9x512xf32> to vector<1x512xf32>
    %66 = vector.broadcast %65 : vector<1x512xf32> to vector<8x512xf32>
    %67 = arith.mulf %64, %66 : vector<8x512xf32>
    %c496_i32_16 = arith.constant 496 : i32
    %68 = tpu.dynamic_rotate %42 by %c496_i32_16 dim 1 : vector<8x512xf32>, i32 -> vector<8x512xf32>
    %69 = vector.extract_strided_slice %43 {offsets = [7, 0], sizes = [1, 512], strides = [1, 1]} : vector<9x512xf32> to vector<1x512xf32>
    %70 = vector.broadcast %69 : vector<1x512xf32> to vector<8x512xf32>
    %71 = arith.mulf %68, %70 : vector<8x512xf32>
    %c495_i32_17 = arith.constant 495 : i32
    %72 = tpu.dynamic_rotate %42 by %c495_i32_17 dim 1 : vector<8x512xf32>, i32 -> vector<8x512xf32>
    %73 = vector.extract_strided_slice %43 {offsets = [8, 0], sizes = [1, 512], strides = [1, 1]} : vector<9x512xf32> to vector<1x512xf32>
    %74 = vector.broadcast %73 : vector<1x512xf32> to vector<8x512xf32>
    %75 = arith.mulf %72, %74 : vector<8x512xf32>
    %76 = tpu.concatenate %47, %51, %55, %59, %42, %63, %67, %71, %75 in 0 : vector<8x512xf32>, vector<8x512xf32>, vector<8x512xf32>, vector<8x512xf32>, vector<8x512xf32>, vector<8x512xf32>, vector<8x512xf32>, vector<8x512xf32>, vector<8x512xf32> -> vector<72x512xf32>
    %77 = arith.truncf %76 : vector<72x512xf32> to vector<72x512xbf16>
    %c0_18 = arith.constant 0 : index
    %c0_19 = arith.constant 0 : index
    %78 = vector.load %arg3[%c0_18, %c0_19] : memref<8x72xbf16, #tpu.memory_space<vmem>>, vector<8x72xbf16>
    %cst_20 = arith.constant dense<0.000000e+00> : vector<8x512xf32>
    %79 = tpu.matmul %78, %77, %cst_20 {dimension_numbers = #tpu.dot_dimension_numbers<[1], [0], [0], [1], [0, 0, 1, 1], [], []>} : vector<8x72xbf16>, vector<72x512xbf16>, vector<8x512xf32> -> vector<8x512xf32>
    %c0_21 = arith.constant 0 : index
    %c0_22 = arith.constant 0 : index
    %80 = vector.load %arg4[%c0_21, %c0_22] : memref<8x1xf32, #tpu.memory_space<vmem>>, vector<8x1xf32>
    %81 = vector.broadcast %80 : vector<8x1xf32> to vector<8x512xf32>
    %82 = arith.addf %79, %81 : vector<8x512xf32>
    %cst_23 = arith.constant 0.000000e+00 : f32
    %83 = vector.broadcast %cst_23 : f32 to vector<8x512xf32>
    %84 = arith.maximumf %82, %83 : vector<8x512xf32>
    %c511_i32_24 = arith.constant 511 : i32
    %85 = tpu.dynamic_rotate %84 by %c511_i32_24 dim 1 : vector<8x512xf32>, i32 -> vector<8x512xf32>
    %86 = arith.maximumf %84, %85 : vector<8x512xf32>
    %c496_i32_25 = arith.constant 496 : i32
    %87 = tpu.dynamic_rotate %86 by %c496_i32_25 dim 1 : vector<8x512xf32>, i32 -> vector<8x512xf32>
    %88 = arith.maximumf %86, %87 : vector<8x512xf32>
    %89 = arith.truncf %88 : vector<8x512xf32> to vector<8x512xbf16>
    %c0_26 = arith.constant 0 : index
    %c0_27 = arith.constant 0 : index
    %90 = vector.load %arg17[%c0_26, %c0_27] : memref<512x128xbf16, #tpu.memory_space<vmem>>, vector<512x128xbf16>
    %cst_28 = arith.constant dense<0.000000e+00> : vector<8x128xf32>
    %91 = tpu.matmul %89, %90, %cst_28 {dimension_numbers = #tpu.dot_dimension_numbers<[1], [0], [0], [1], [0, 0, 1, 1], [], []>} : vector<8x512xbf16>, vector<512x128xbf16>, vector<8x128xf32> -> vector<8x128xf32>
    %c0_29 = arith.constant 0 : index
    %c0_30 = arith.constant 0 : index
    %92 = vector.load %arg16[%c0_29, %c0_30] : memref<9x128xf32, #tpu.memory_space<vmem>>, vector<9x128xf32>
    %c9_i32 = arith.constant 9 : i32
    %93 = tpu.dynamic_rotate %91 by %c9_i32 dim 1 : vector<8x128xf32>, i32 -> vector<8x128xf32>
    %94 = vector.extract_strided_slice %92 {offsets = [0, 0], sizes = [1, 128], strides = [1, 1]} : vector<9x128xf32> to vector<1x128xf32>
    %95 = vector.broadcast %94 : vector<1x128xf32> to vector<8x128xf32>
    %96 = arith.mulf %93, %95 : vector<8x128xf32>
    %c8_i32 = arith.constant 8 : i32
    %97 = tpu.dynamic_rotate %91 by %c8_i32 dim 1 : vector<8x128xf32>, i32 -> vector<8x128xf32>
    %98 = vector.extract_strided_slice %92 {offsets = [1, 0], sizes = [1, 128], strides = [1, 1]} : vector<9x128xf32> to vector<1x128xf32>
    %99 = vector.broadcast %98 : vector<1x128xf32> to vector<8x128xf32>
    %100 = arith.mulf %97, %99 : vector<8x128xf32>
    %c7_i32 = arith.constant 7 : i32
    %101 = tpu.dynamic_rotate %91 by %c7_i32 dim 1 : vector<8x128xf32>, i32 -> vector<8x128xf32>
    %102 = vector.extract_strided_slice %92 {offsets = [2, 0], sizes = [1, 128], strides = [1, 1]} : vector<9x128xf32> to vector<1x128xf32>
    %103 = vector.broadcast %102 : vector<1x128xf32> to vector<8x128xf32>
    %104 = arith.mulf %101, %103 : vector<8x128xf32>
    %c1_i32_31 = arith.constant 1 : i32
    %105 = tpu.dynamic_rotate %91 by %c1_i32_31 dim 1 : vector<8x128xf32>, i32 -> vector<8x128xf32>
    %106 = vector.extract_strided_slice %92 {offsets = [3, 0], sizes = [1, 128], strides = [1, 1]} : vector<9x128xf32> to vector<1x128xf32>
    %107 = vector.broadcast %106 : vector<1x128xf32> to vector<8x128xf32>
    %108 = arith.mulf %105, %107 : vector<8x128xf32>
    %c127_i32 = arith.constant 127 : i32
    %109 = tpu.dynamic_rotate %91 by %c127_i32 dim 1 : vector<8x128xf32>, i32 -> vector<8x128xf32>
    %110 = vector.extract_strided_slice %92 {offsets = [5, 0], sizes = [1, 128], strides = [1, 1]} : vector<9x128xf32> to vector<1x128xf32>
    %111 = vector.broadcast %110 : vector<1x128xf32> to vector<8x128xf32>
    %112 = arith.mulf %109, %111 : vector<8x128xf32>
    %c121_i32 = arith.constant 121 : i32
    %113 = tpu.dynamic_rotate %91 by %c121_i32 dim 1 : vector<8x128xf32>, i32 -> vector<8x128xf32>
    %114 = vector.extract_strided_slice %92 {offsets = [6, 0], sizes = [1, 128], strides = [1, 1]} : vector<9x128xf32> to vector<1x128xf32>
    %115 = vector.broadcast %114 : vector<1x128xf32> to vector<8x128xf32>
    %116 = arith.mulf %113, %115 : vector<8x128xf32>
    %c120_i32 = arith.constant 120 : i32
    %117 = tpu.dynamic_rotate %91 by %c120_i32 dim 1 : vector<8x128xf32>, i32 -> vector<8x128xf32>
    %118 = vector.extract_strided_slice %92 {offsets = [7, 0], sizes = [1, 128], strides = [1, 1]} : vector<9x128xf32> to vector<1x128xf32>
    %119 = vector.broadcast %118 : vector<1x128xf32> to vector<8x128xf32>
    %120 = arith.mulf %117, %119 : vector<8x128xf32>
    %c119_i32 = arith.constant 119 : i32
    %121 = tpu.dynamic_rotate %91 by %c119_i32 dim 1 : vector<8x128xf32>, i32 -> vector<8x128xf32>
    %122 = vector.extract_strided_slice %92 {offsets = [8, 0], sizes = [1, 128], strides = [1, 1]} : vector<9x128xf32> to vector<1x128xf32>
    %123 = vector.broadcast %122 : vector<1x128xf32> to vector<8x128xf32>
    %124 = arith.mulf %121, %123 : vector<8x128xf32>
    %125 = tpu.concatenate %96, %100, %104, %108, %91, %112, %116, %120, %124 in 0 : vector<8x128xf32>, vector<8x128xf32>, vector<8x128xf32>, vector<8x128xf32>, vector<8x128xf32>, vector<8x128xf32>, vector<8x128xf32>, vector<8x128xf32>, vector<8x128xf32> -> vector<72x128xf32>
    %126 = arith.truncf %125 : vector<72x128xf32> to vector<72x128xbf16>
    %c0_32 = arith.constant 0 : index
    %c0_33 = arith.constant 0 : index
    %127 = vector.load %arg5[%c0_32, %c0_33] : memref<16x72xbf16, #tpu.memory_space<vmem>>, vector<16x72xbf16>
    %cst_34 = arith.constant dense<0.000000e+00> : vector<16x128xf32>
    %128 = tpu.matmul %127, %126, %cst_34 {dimension_numbers = #tpu.dot_dimension_numbers<[1], [0], [0], [1], [0, 0, 1, 1], [], []>} : vector<16x72xbf16>, vector<72x128xbf16>, vector<16x128xf32> -> vector<16x128xf32>
    %c0_35 = arith.constant 0 : index
    %c0_36 = arith.constant 0 : index
    %129 = vector.load %arg6[%c0_35, %c0_36] : memref<16x1xf32, #tpu.memory_space<vmem>>, vector<16x1xf32>
    %130 = vector.broadcast %129 : vector<16x1xf32> to vector<16x128xf32>
    %131 = arith.addf %128, %130 : vector<16x128xf32>
    %cst_37 = arith.constant 0.000000e+00 : f32
    %132 = vector.broadcast %cst_37 : f32 to vector<16x128xf32>
    %133 = arith.maximumf %131, %132 : vector<16x128xf32>
    %c0_38 = arith.constant 0 : index
    %c0_39 = arith.constant 0 : index
    %134 = vector.load %arg16[%c0_38, %c0_39] : memref<9x128xf32, #tpu.memory_space<vmem>>, vector<9x128xf32>
    %c9_i32_40 = arith.constant 9 : i32
    %135 = tpu.dynamic_rotate %133 by %c9_i32_40 dim 1 : vector<16x128xf32>, i32 -> vector<16x128xf32>
    %136 = vector.extract_strided_slice %134 {offsets = [0, 0], sizes = [1, 128], strides = [1, 1]} : vector<9x128xf32> to vector<1x128xf32>
    %137 = vector.broadcast %136 : vector<1x128xf32> to vector<16x128xf32>
    %138 = arith.mulf %135, %137 : vector<16x128xf32>
    %c8_i32_41 = arith.constant 8 : i32
    %139 = tpu.dynamic_rotate %133 by %c8_i32_41 dim 1 : vector<16x128xf32>, i32 -> vector<16x128xf32>
    %140 = vector.extract_strided_slice %134 {offsets = [1, 0], sizes = [1, 128], strides = [1, 1]} : vector<9x128xf32> to vector<1x128xf32>
    %141 = vector.broadcast %140 : vector<1x128xf32> to vector<16x128xf32>
    %142 = arith.mulf %139, %141 : vector<16x128xf32>
    %c7_i32_42 = arith.constant 7 : i32
    %143 = tpu.dynamic_rotate %133 by %c7_i32_42 dim 1 : vector<16x128xf32>, i32 -> vector<16x128xf32>
    %144 = vector.extract_strided_slice %134 {offsets = [2, 0], sizes = [1, 128], strides = [1, 1]} : vector<9x128xf32> to vector<1x128xf32>
    %145 = vector.broadcast %144 : vector<1x128xf32> to vector<16x128xf32>
    %146 = arith.mulf %143, %145 : vector<16x128xf32>
    %c1_i32_43 = arith.constant 1 : i32
    %147 = tpu.dynamic_rotate %133 by %c1_i32_43 dim 1 : vector<16x128xf32>, i32 -> vector<16x128xf32>
    %148 = vector.extract_strided_slice %134 {offsets = [3, 0], sizes = [1, 128], strides = [1, 1]} : vector<9x128xf32> to vector<1x128xf32>
    %149 = vector.broadcast %148 : vector<1x128xf32> to vector<16x128xf32>
    %150 = arith.mulf %147, %149 : vector<16x128xf32>
    %c127_i32_44 = arith.constant 127 : i32
    %151 = tpu.dynamic_rotate %133 by %c127_i32_44 dim 1 : vector<16x128xf32>, i32 -> vector<16x128xf32>
    %152 = vector.extract_strided_slice %134 {offsets = [5, 0], sizes = [1, 128], strides = [1, 1]} : vector<9x128xf32> to vector<1x128xf32>
    %153 = vector.broadcast %152 : vector<1x128xf32> to vector<16x128xf32>
    %154 = arith.mulf %151, %153 : vector<16x128xf32>
    %c121_i32_45 = arith.constant 121 : i32
    %155 = tpu.dynamic_rotate %133 by %c121_i32_45 dim 1 : vector<16x128xf32>, i32 -> vector<16x128xf32>
    %156 = vector.extract_strided_slice %134 {offsets = [6, 0], sizes = [1, 128], strides = [1, 1]} : vector<9x128xf32> to vector<1x128xf32>
    %157 = vector.broadcast %156 : vector<1x128xf32> to vector<16x128xf32>
    %158 = arith.mulf %155, %157 : vector<16x128xf32>
    %c120_i32_46 = arith.constant 120 : i32
    %159 = tpu.dynamic_rotate %133 by %c120_i32_46 dim 1 : vector<16x128xf32>, i32 -> vector<16x128xf32>
    %160 = vector.extract_strided_slice %134 {offsets = [7, 0], sizes = [1, 128], strides = [1, 1]} : vector<9x128xf32> to vector<1x128xf32>
    %161 = vector.broadcast %160 : vector<1x128xf32> to vector<16x128xf32>
    %162 = arith.mulf %159, %161 : vector<16x128xf32>
    %c119_i32_47 = arith.constant 119 : i32
    %163 = tpu.dynamic_rotate %133 by %c119_i32_47 dim 1 : vector<16x128xf32>, i32 -> vector<16x128xf32>
    %164 = vector.extract_strided_slice %134 {offsets = [8, 0], sizes = [1, 128], strides = [1, 1]} : vector<9x128xf32> to vector<1x128xf32>
    %165 = vector.broadcast %164 : vector<1x128xf32> to vector<16x128xf32>
    %166 = arith.mulf %163, %165 : vector<16x128xf32>
    %167 = tpu.concatenate %138, %142, %146, %150, %133, %154, %158, %162, %166 in 0 : vector<16x128xf32>, vector<16x128xf32>, vector<16x128xf32>, vector<16x128xf32>, vector<16x128xf32>, vector<16x128xf32>, vector<16x128xf32>, vector<16x128xf32>, vector<16x128xf32> -> vector<144x128xf32>
    %168 = arith.truncf %167 : vector<144x128xf32> to vector<144x128xbf16>
    %c0_48 = arith.constant 0 : index
    %c0_49 = arith.constant 0 : index
    %169 = vector.load %arg7[%c0_48, %c0_49] : memref<16x144xbf16, #tpu.memory_space<vmem>>, vector<16x144xbf16>
    %cst_50 = arith.constant dense<0.000000e+00> : vector<16x128xf32>
    %170 = tpu.matmul %169, %168, %cst_50 {dimension_numbers = #tpu.dot_dimension_numbers<[1], [0], [0], [1], [0, 0, 1, 1], [], []>} : vector<16x144xbf16>, vector<144x128xbf16>, vector<16x128xf32> -> vector<16x128xf32>
    %c0_51 = arith.constant 0 : index
    %c0_52 = arith.constant 0 : index
    %171 = vector.load %arg8[%c0_51, %c0_52] : memref<16x1xf32, #tpu.memory_space<vmem>>, vector<16x1xf32>
    %172 = vector.broadcast %171 : vector<16x1xf32> to vector<16x128xf32>
    %173 = arith.addf %170, %172 : vector<16x128xf32>
    %cst_53 = arith.constant 0.000000e+00 : f32
    %174 = vector.broadcast %cst_53 : f32 to vector<16x128xf32>
    %175 = arith.maximumf %173, %174 : vector<16x128xf32>
    %c127_i32_54 = arith.constant 127 : i32
    %176 = tpu.dynamic_rotate %175 by %c127_i32_54 dim 1 : vector<16x128xf32>, i32 -> vector<16x128xf32>
    %177 = arith.maximumf %175, %176 : vector<16x128xf32>
    %c120_i32_55 = arith.constant 120 : i32
    %178 = tpu.dynamic_rotate %177 by %c120_i32_55 dim 1 : vector<16x128xf32>, i32 -> vector<16x128xf32>
    %179 = arith.maximumf %177, %178 : vector<16x128xf32>
    %180 = arith.truncf %179 : vector<16x128xf32> to vector<16x128xbf16>
    %c0_56 = arith.constant 0 : index
    %c0_57 = arith.constant 0 : index
    %181 = vector.load %arg18[%c0_56, %c0_57] : memref<128x32xbf16, #tpu.memory_space<vmem>>, vector<128x32xbf16>
    %cst_58 = arith.constant dense<0.000000e+00> : vector<16x32xf32>
    %182 = tpu.matmul %180, %181, %cst_58 {dimension_numbers = #tpu.dot_dimension_numbers<[1], [0], [0], [1], [0, 0, 1, 1], [], []>} : vector<16x128xbf16>, vector<128x32xbf16>, vector<16x32xf32> -> vector<16x32xf32>
    %183 = arith.truncf %182 : vector<16x32xf32> to vector<16x32xbf16>
    %c0_59 = arith.constant 0 : index
    %c0_60 = arith.constant 0 : index
    %184 = vector.load %arg19[%c0_59, %c0_60] : memref<32x128xbf16, #tpu.memory_space<vmem>>, vector<32x128xbf16>
    %cst_61 = arith.constant dense<0.000000e+00> : vector<16x128xf32>
    %185 = tpu.matmul %183, %184, %cst_61 {dimension_numbers = #tpu.dot_dimension_numbers<[1], [0], [0], [1], [0, 0, 1, 1], [], []>} : vector<16x32xbf16>, vector<32x128xbf16>, vector<16x128xf32> -> vector<16x128xf32>
    %c0_62 = arith.constant 0 : index
    %c0_63 = arith.constant 0 : index
    %186 = vector.load %arg16[%c0_62, %c0_63] : memref<9x128xf32, #tpu.memory_space<vmem>>, vector<9x128xf32>
    %c9_i32_64 = arith.constant 9 : i32
    %187 = tpu.dynamic_rotate %185 by %c9_i32_64 dim 1 : vector<16x128xf32>, i32 -> vector<16x128xf32>
    %188 = vector.extract_strided_slice %186 {offsets = [0, 0], sizes = [1, 128], strides = [1, 1]} : vector<9x128xf32> to vector<1x128xf32>
    %189 = vector.broadcast %188 : vector<1x128xf32> to vector<16x128xf32>
    %190 = arith.mulf %187, %189 : vector<16x128xf32>
    %c8_i32_65 = arith.constant 8 : i32
    %191 = tpu.dynamic_rotate %185 by %c8_i32_65 dim 1 : vector<16x128xf32>, i32 -> vector<16x128xf32>
    %192 = vector.extract_strided_slice %186 {offsets = [1, 0], sizes = [1, 128], strides = [1, 1]} : vector<9x128xf32> to vector<1x128xf32>
    %193 = vector.broadcast %192 : vector<1x128xf32> to vector<16x128xf32>
    %194 = arith.mulf %191, %193 : vector<16x128xf32>
    %c7_i32_66 = arith.constant 7 : i32
    %195 = tpu.dynamic_rotate %185 by %c7_i32_66 dim 1 : vector<16x128xf32>, i32 -> vector<16x128xf32>
    %196 = vector.extract_strided_slice %186 {offsets = [2, 0], sizes = [1, 128], strides = [1, 1]} : vector<9x128xf32> to vector<1x128xf32>
    %197 = vector.broadcast %196 : vector<1x128xf32> to vector<16x128xf32>
    %198 = arith.mulf %195, %197 : vector<16x128xf32>
    %c1_i32_67 = arith.constant 1 : i32
    %199 = tpu.dynamic_rotate %185 by %c1_i32_67 dim 1 : vector<16x128xf32>, i32 -> vector<16x128xf32>
    %200 = vector.extract_strided_slice %186 {offsets = [3, 0], sizes = [1, 128], strides = [1, 1]} : vector<9x128xf32> to vector<1x128xf32>
    %201 = vector.broadcast %200 : vector<1x128xf32> to vector<16x128xf32>
    %202 = arith.mulf %199, %201 : vector<16x128xf32>
    %c127_i32_68 = arith.constant 127 : i32
    %203 = tpu.dynamic_rotate %185 by %c127_i32_68 dim 1 : vector<16x128xf32>, i32 -> vector<16x128xf32>
    %204 = vector.extract_strided_slice %186 {offsets = [5, 0], sizes = [1, 128], strides = [1, 1]} : vector<9x128xf32> to vector<1x128xf32>
    %205 = vector.broadcast %204 : vector<1x128xf32> to vector<16x128xf32>
    %206 = arith.mulf %203, %205 : vector<16x128xf32>
    %c121_i32_69 = arith.constant 121 : i32
    %207 = tpu.dynamic_rotate %185 by %c121_i32_69 dim 1 : vector<16x128xf32>, i32 -> vector<16x128xf32>
    %208 = vector.extract_strided_slice %186 {offsets = [6, 0], sizes = [1, 128], strides = [1, 1]} : vector<9x128xf32> to vector<1x128xf32>
    %209 = vector.broadcast %208 : vector<1x128xf32> to vector<16x128xf32>
    %210 = arith.mulf %207, %209 : vector<16x128xf32>
    %c120_i32_70 = arith.constant 120 : i32
    %211 = tpu.dynamic_rotate %185 by %c120_i32_70 dim 1 : vector<16x128xf32>, i32 -> vector<16x128xf32>
    %212 = vector.extract_strided_slice %186 {offsets = [7, 0], sizes = [1, 128], strides = [1, 1]} : vector<9x128xf32> to vector<1x128xf32>
    %213 = vector.broadcast %212 : vector<1x128xf32> to vector<16x128xf32>
    %214 = arith.mulf %211, %213 : vector<16x128xf32>
    %c119_i32_71 = arith.constant 119 : i32
    %215 = tpu.dynamic_rotate %185 by %c119_i32_71 dim 1 : vector<16x128xf32>, i32 -> vector<16x128xf32>
    %216 = vector.extract_strided_slice %186 {offsets = [8, 0], sizes = [1, 128], strides = [1, 1]} : vector<9x128xf32> to vector<1x128xf32>
    %217 = vector.broadcast %216 : vector<1x128xf32> to vector<16x128xf32>
    %218 = arith.mulf %215, %217 : vector<16x128xf32>
    %219 = tpu.concatenate %190, %194, %198, %202, %185, %206, %210, %214, %218 in 0 : vector<16x128xf32>, vector<16x128xf32>, vector<16x128xf32>, vector<16x128xf32>, vector<16x128xf32>, vector<16x128xf32>, vector<16x128xf32>, vector<16x128xf32>, vector<16x128xf32> -> vector<144x128xf32>
    %220 = arith.truncf %219 : vector<144x128xf32> to vector<144x128xbf16>
    %c0_72 = arith.constant 0 : index
    %c0_73 = arith.constant 0 : index
    %221 = vector.load %arg9[%c0_72, %c0_73] : memref<8x144xbf16, #tpu.memory_space<vmem>>, vector<8x144xbf16>
    %cst_74 = arith.constant dense<0.000000e+00> : vector<8x128xf32>
    %222 = tpu.matmul %221, %220, %cst_74 {dimension_numbers = #tpu.dot_dimension_numbers<[1], [0], [0], [1], [0, 0, 1, 1], [], []>} : vector<8x144xbf16>, vector<144x128xbf16>, vector<8x128xf32> -> vector<8x128xf32>
    %c0_75 = arith.constant 0 : index
    %c0_76 = arith.constant 0 : index
    %223 = vector.load %arg10[%c0_75, %c0_76] : memref<8x1xf32, #tpu.memory_space<vmem>>, vector<8x1xf32>
    %224 = vector.broadcast %223 : vector<8x1xf32> to vector<8x128xf32>
    %225 = arith.addf %222, %224 : vector<8x128xf32>
    %cst_77 = arith.constant 0.000000e+00 : f32
    %226 = vector.broadcast %cst_77 : f32 to vector<8x128xf32>
    %227 = arith.maximumf %225, %226 : vector<8x128xf32>
    %228 = arith.truncf %227 : vector<8x128xf32> to vector<8x128xbf16>
    %c0_78 = arith.constant 0 : index
    %c0_79 = arith.constant 0 : index
    %229 = vector.load %arg20[%c0_78, %c0_79] : memref<128x512xbf16, #tpu.memory_space<vmem>>, vector<128x512xbf16>
    %cst_80 = arith.constant dense<0.000000e+00> : vector<8x512xf32>
    %230 = tpu.matmul %228, %229, %cst_80 {dimension_numbers = #tpu.dot_dimension_numbers<[1], [0], [0], [1], [0, 0, 1, 1], [], []>} : vector<8x128xbf16>, vector<128x512xbf16>, vector<8x512xf32> -> vector<8x512xf32>
    %c0_81 = arith.constant 0 : index
    %c0_82 = arith.constant 0 : index
    %231 = vector.load %arg15[%c0_81, %c0_82] : memref<9x512xf32, #tpu.memory_space<vmem>>, vector<9x512xf32>
    %c17_i32_83 = arith.constant 17 : i32
    %232 = tpu.dynamic_rotate %230 by %c17_i32_83 dim 1 : vector<8x512xf32>, i32 -> vector<8x512xf32>
    %233 = vector.extract_strided_slice %231 {offsets = [0, 0], sizes = [1, 512], strides = [1, 1]} : vector<9x512xf32> to vector<1x512xf32>
    %234 = vector.broadcast %233 : vector<1x512xf32> to vector<8x512xf32>
    %235 = arith.mulf %232, %234 : vector<8x512xf32>
    %c16_i32_84 = arith.constant 16 : i32
    %236 = tpu.dynamic_rotate %230 by %c16_i32_84 dim 1 : vector<8x512xf32>, i32 -> vector<8x512xf32>
    %237 = vector.extract_strided_slice %231 {offsets = [1, 0], sizes = [1, 512], strides = [1, 1]} : vector<9x512xf32> to vector<1x512xf32>
    %238 = vector.broadcast %237 : vector<1x512xf32> to vector<8x512xf32>
    %239 = arith.mulf %236, %238 : vector<8x512xf32>
    %c15_i32_85 = arith.constant 15 : i32
    %240 = tpu.dynamic_rotate %230 by %c15_i32_85 dim 1 : vector<8x512xf32>, i32 -> vector<8x512xf32>
    %241 = vector.extract_strided_slice %231 {offsets = [2, 0], sizes = [1, 512], strides = [1, 1]} : vector<9x512xf32> to vector<1x512xf32>
    %242 = vector.broadcast %241 : vector<1x512xf32> to vector<8x512xf32>
    %243 = arith.mulf %240, %242 : vector<8x512xf32>
    %c1_i32_86 = arith.constant 1 : i32
    %244 = tpu.dynamic_rotate %230 by %c1_i32_86 dim 1 : vector<8x512xf32>, i32 -> vector<8x512xf32>
    %245 = vector.extract_strided_slice %231 {offsets = [3, 0], sizes = [1, 512], strides = [1, 1]} : vector<9x512xf32> to vector<1x512xf32>
    %246 = vector.broadcast %245 : vector<1x512xf32> to vector<8x512xf32>
    %247 = arith.mulf %244, %246 : vector<8x512xf32>
    %c511_i32_87 = arith.constant 511 : i32
    %248 = tpu.dynamic_rotate %230 by %c511_i32_87 dim 1 : vector<8x512xf32>, i32 -> vector<8x512xf32>
    %249 = vector.extract_strided_slice %231 {offsets = [5, 0], sizes = [1, 512], strides = [1, 1]} : vector<9x512xf32> to vector<1x512xf32>
    %250 = vector.broadcast %249 : vector<1x512xf32> to vector<8x512xf32>
    %251 = arith.mulf %248, %250 : vector<8x512xf32>
    %c497_i32_88 = arith.constant 497 : i32
    %252 = tpu.dynamic_rotate %230 by %c497_i32_88 dim 1 : vector<8x512xf32>, i32 -> vector<8x512xf32>
    %253 = vector.extract_strided_slice %231 {offsets = [6, 0], sizes = [1, 512], strides = [1, 1]} : vector<9x512xf32> to vector<1x512xf32>
    %254 = vector.broadcast %253 : vector<1x512xf32> to vector<8x512xf32>
    %255 = arith.mulf %252, %254 : vector<8x512xf32>
    %c496_i32_89 = arith.constant 496 : i32
    %256 = tpu.dynamic_rotate %230 by %c496_i32_89 dim 1 : vector<8x512xf32>, i32 -> vector<8x512xf32>
    %257 = vector.extract_strided_slice %231 {offsets = [7, 0], sizes = [1, 512], strides = [1, 1]} : vector<9x512xf32> to vector<1x512xf32>
    %258 = vector.broadcast %257 : vector<1x512xf32> to vector<8x512xf32>
    %259 = arith.mulf %256, %258 : vector<8x512xf32>
    %c495_i32_90 = arith.constant 495 : i32
    %260 = tpu.dynamic_rotate %230 by %c495_i32_90 dim 1 : vector<8x512xf32>, i32 -> vector<8x512xf32>
    %261 = vector.extract_strided_slice %231 {offsets = [8, 0], sizes = [1, 512], strides = [1, 1]} : vector<9x512xf32> to vector<1x512xf32>
    %262 = vector.broadcast %261 : vector<1x512xf32> to vector<8x512xf32>
    %263 = arith.mulf %260, %262 : vector<8x512xf32>
    %264 = tpu.concatenate %235, %239, %243, %247, %230, %251, %255, %259, %263 in 0 : vector<8x512xf32>, vector<8x512xf32>, vector<8x512xf32>, vector<8x512xf32>, vector<8x512xf32>, vector<8x512xf32>, vector<8x512xf32>, vector<8x512xf32>, vector<8x512xf32> -> vector<72x512xf32>
    %265 = arith.truncf %264 : vector<72x512xf32> to vector<72x512xbf16>
    %c0_91 = arith.constant 0 : index
    %c0_92 = arith.constant 0 : index
    %266 = vector.load %arg11[%c0_91, %c0_92] : memref<8x72xbf16, #tpu.memory_space<vmem>>, vector<8x72xbf16>
    %cst_93 = arith.constant dense<0.000000e+00> : vector<8x512xf32>
    %267 = tpu.matmul %266, %265, %cst_93 {dimension_numbers = #tpu.dot_dimension_numbers<[1], [0], [0], [1], [0, 0, 1, 1], [], []>} : vector<8x72xbf16>, vector<72x512xbf16>, vector<8x512xf32> -> vector<8x512xf32>
    %c0_94 = arith.constant 0 : index
    %c0_95 = arith.constant 0 : index
    %268 = vector.load %arg12[%c0_94, %c0_95] : memref<8x1xf32, #tpu.memory_space<vmem>>, vector<8x1xf32>
    %269 = vector.broadcast %268 : vector<8x1xf32> to vector<8x512xf32>
    %270 = arith.addf %267, %269 : vector<8x512xf32>
    %cst_96 = arith.constant 0.000000e+00 : f32
    %271 = vector.broadcast %cst_96 : f32 to vector<8x512xf32>
    %272 = arith.maximumf %270, %271 : vector<8x512xf32>
    %c0_97 = arith.constant 0 : index
    %c0_98 = arith.constant 0 : index
    %273 = vector.load %arg15[%c0_97, %c0_98] : memref<9x512xf32, #tpu.memory_space<vmem>>, vector<9x512xf32>
    %c17_i32_99 = arith.constant 17 : i32
    %274 = tpu.dynamic_rotate %272 by %c17_i32_99 dim 1 : vector<8x512xf32>, i32 -> vector<8x512xf32>
    %275 = vector.extract_strided_slice %273 {offsets = [0, 0], sizes = [1, 512], strides = [1, 1]} : vector<9x512xf32> to vector<1x512xf32>
    %276 = vector.broadcast %275 : vector<1x512xf32> to vector<8x512xf32>
    %277 = arith.mulf %274, %276 : vector<8x512xf32>
    %c16_i32_100 = arith.constant 16 : i32
    %278 = tpu.dynamic_rotate %272 by %c16_i32_100 dim 1 : vector<8x512xf32>, i32 -> vector<8x512xf32>
    %279 = vector.extract_strided_slice %273 {offsets = [1, 0], sizes = [1, 512], strides = [1, 1]} : vector<9x512xf32> to vector<1x512xf32>
    %280 = vector.broadcast %279 : vector<1x512xf32> to vector<8x512xf32>
    %281 = arith.mulf %278, %280 : vector<8x512xf32>
    %c15_i32_101 = arith.constant 15 : i32
    %282 = tpu.dynamic_rotate %272 by %c15_i32_101 dim 1 : vector<8x512xf32>, i32 -> vector<8x512xf32>
    %283 = vector.extract_strided_slice %273 {offsets = [2, 0], sizes = [1, 512], strides = [1, 1]} : vector<9x512xf32> to vector<1x512xf32>
    %284 = vector.broadcast %283 : vector<1x512xf32> to vector<8x512xf32>
    %285 = arith.mulf %282, %284 : vector<8x512xf32>
    %c1_i32_102 = arith.constant 1 : i32
    %286 = tpu.dynamic_rotate %272 by %c1_i32_102 dim 1 : vector<8x512xf32>, i32 -> vector<8x512xf32>
    %287 = vector.extract_strided_slice %273 {offsets = [3, 0], sizes = [1, 512], strides = [1, 1]} : vector<9x512xf32> to vector<1x512xf32>
    %288 = vector.broadcast %287 : vector<1x512xf32> to vector<8x512xf32>
    %289 = arith.mulf %286, %288 : vector<8x512xf32>
    %c511_i32_103 = arith.constant 511 : i32
    %290 = tpu.dynamic_rotate %272 by %c511_i32_103 dim 1 : vector<8x512xf32>, i32 -> vector<8x512xf32>
    %291 = vector.extract_strided_slice %273 {offsets = [5, 0], sizes = [1, 512], strides = [1, 1]} : vector<9x512xf32> to vector<1x512xf32>
    %292 = vector.broadcast %291 : vector<1x512xf32> to vector<8x512xf32>
    %293 = arith.mulf %290, %292 : vector<8x512xf32>
    %c497_i32_104 = arith.constant 497 : i32
    %294 = tpu.dynamic_rotate %272 by %c497_i32_104 dim 1 : vector<8x512xf32>, i32 -> vector<8x512xf32>
    %295 = vector.extract_strided_slice %273 {offsets = [6, 0], sizes = [1, 512], strides = [1, 1]} : vector<9x512xf32> to vector<1x512xf32>
    %296 = vector.broadcast %295 : vector<1x512xf32> to vector<8x512xf32>
    %297 = arith.mulf %294, %296 : vector<8x512xf32>
    %c496_i32_105 = arith.constant 496 : i32
    %298 = tpu.dynamic_rotate %272 by %c496_i32_105 dim 1 : vector<8x512xf32>, i32 -> vector<8x512xf32>
    %299 = vector.extract_strided_slice %273 {offsets = [7, 0], sizes = [1, 512], strides = [1, 1]} : vector<9x512xf32> to vector<1x512xf32>
    %300 = vector.broadcast %299 : vector<1x512xf32> to vector<8x512xf32>
    %301 = arith.mulf %298, %300 : vector<8x512xf32>
    %c495_i32_106 = arith.constant 495 : i32
    %302 = tpu.dynamic_rotate %272 by %c495_i32_106 dim 1 : vector<8x512xf32>, i32 -> vector<8x512xf32>
    %303 = vector.extract_strided_slice %273 {offsets = [8, 0], sizes = [1, 512], strides = [1, 1]} : vector<9x512xf32> to vector<1x512xf32>
    %304 = vector.broadcast %303 : vector<1x512xf32> to vector<8x512xf32>
    %305 = arith.mulf %302, %304 : vector<8x512xf32>
    %306 = tpu.concatenate %277, %281, %285, %289, %272, %293, %297, %301, %305 in 0 : vector<8x512xf32>, vector<8x512xf32>, vector<8x512xf32>, vector<8x512xf32>, vector<8x512xf32>, vector<8x512xf32>, vector<8x512xf32>, vector<8x512xf32>, vector<8x512xf32> -> vector<72x512xf32>
    %307 = arith.truncf %306 : vector<72x512xf32> to vector<72x512xbf16>
    %c0_107 = arith.constant 0 : index
    %c0_108 = arith.constant 0 : index
    %308 = vector.load %arg13[%c0_107, %c0_108] : memref<8x72xbf16, #tpu.memory_space<vmem>>, vector<8x72xbf16>
    %cst_109 = arith.constant dense<0.000000e+00> : vector<8x512xf32>
    %309 = tpu.matmul %308, %307, %cst_109 {dimension_numbers = #tpu.dot_dimension_numbers<[1], [0], [0], [1], [0, 0, 1, 1], [], []>} : vector<8x72xbf16>, vector<72x512xbf16>, vector<8x512xf32> -> vector<8x512xf32>
    %c0_110 = arith.constant 0 : index
    %c0_111 = arith.constant 0 : index
    %310 = vector.load %arg14[%c0_110, %c0_111] : memref<8x1xf32, #tpu.memory_space<vmem>>, vector<8x1xf32>
    %311 = vector.broadcast %310 : vector<8x1xf32> to vector<8x512xf32>
    %312 = arith.addf %309, %311 : vector<8x512xf32>
    %c0_112 = arith.constant 0 : index
    %c0_113 = arith.constant 0 : index
    %313 = vector.load %arg21[%c0_112, %c0_113] : memref<8x512xf32, #tpu.memory_space<vmem>>, vector<8x512xf32>
    tpu.vector_store %arg21[%c0_112, %c0_113], %312 {strides = array<i32>} : memref<8x512xf32, #tpu.memory_space<vmem>>, vector<8x512xf32>,
    return
  }
}

</mosaic_0001>

<llo_original>
// kernel: unet_forward.1
$region0: #{unet_forward.1}
  #allocation0 [shape = 'u32[]', space=smem, size = 0x4, offset = 0x4, fixed_abs, tag = 'smem constant byte address 0x4 - core index']
  #allocation1 [shape = 'u32[144,128]{1,0:T(1,128)}', space=vmem, size = 0x12000, scoped, tag = 'internal scratch']
  %s0 = inlined_call_operand.vmem [shape: f32[8,512], index: 0, kind: input, shape index: {}]
  %s1 = inlined_call_operand.vmem [shape: bf16[8,72], index: 1, kind: input, shape index: {}]
  %s2 = inlined_call_operand.vmem [shape: f32[8,1], index: 2, kind: input, shape index: {}]
  %s3 = inlined_call_operand.vmem [shape: bf16[8,72], index: 3, kind: input, shape index: {}]
  %s4 = inlined_call_operand.vmem [shape: f32[8,1], index: 4, kind: input, shape index: {}]
  %s5 = inlined_call_operand.vmem [shape: bf16[16,72], index: 5, kind: input, shape index: {}]
  %s6 = inlined_call_operand.vmem [shape: f32[16,1], index: 6, kind: input, shape index: {}]
  %s7 = inlined_call_operand.vmem [shape: bf16[16,144], index: 7, kind: input, shape index: {}]
  %s8 = inlined_call_operand.vmem [shape: f32[16,1], index: 8, kind: input, shape index: {}]
  %s9 = inlined_call_operand.vmem [shape: bf16[8,144], index: 9, kind: input, shape index: {}]
  %s10 = inlined_call_operand.vmem [shape: f32[8,1], index: 10, kind: input, shape index: {}]
  %s11 = inlined_call_operand.vmem [shape: bf16[8,72], index: 11, kind: input, shape index: {}]
  %s12 = inlined_call_operand.vmem [shape: f32[8,1], index: 12, kind: input, shape index: {}]
  %s13 = inlined_call_operand.vmem [shape: bf16[8,72], index: 13, kind: input, shape index: {}]
  %s14 = inlined_call_operand.vmem [shape: f32[8,1], index: 14, kind: input, shape index: {}]
  %s15 = inlined_call_operand.vmem [shape: f32[9,512], index: 15, kind: input, shape index: {}]
  %s16 = inlined_call_operand.vmem [shape: f32[9,128], index: 16, kind: input, shape index: {}]
  %s17 = inlined_call_operand.vmem [shape: bf16[512,128], index: 17, kind: input, shape index: {}]
  %s18 = inlined_call_operand.vmem [shape: bf16[128,32], index: 18, kind: input, shape index: {}]
  %s19 = inlined_call_operand.vmem [shape: bf16[32,128], index: 19, kind: input, shape index: {}]
  %s20 = inlined_call_operand.vmem [shape: bf16[128,512], index: 20, kind: input, shape index: {}]
  %s21 = inlined_call_operand.vmem [shape: f32[8,512], index: 21, kind: output, shape index: {}]
  %s22 = sld [smem:[#allocation0]]
  $region94: #{unet_forward.1} parent=0
    _
  %s24 = ssub.s32 1, %s22
  %s25 = scalar_select 0, %s24, %s22
  // Predicated region
  $region2: #{unet_forward.1} parent=0 // pred_check
    _
  $region3: #{unet_forward.1} parent=0 // pred_check_branch
    %27 = sbr.rel (0) target = $region5
  $region4: #{unet_forward.1} parent=0 // pred_region
    _
  $region5: #{unet_forward.1} parent=0 // pred_fallthru
    _
  // Predicated region
  $region6: #{unet_forward.1} parent=0 // pred_check
    _
  $region7: #{unet_forward.1} parent=0 // pred_check_branch
    %29 = sbr.rel (0) target = $region9
  $region8: #{unet_forward.1} parent=0 // pred_region
    _
  $region9: #{unet_forward.1} parent=0 // pred_fallthru
    _
  // Predicated region
  $region10: #{unet_forward.1} parent=0 // pred_check
    _
  $region11: #{unet_forward.1} parent=0 // pred_check_branch
    %31 = sbr.rel (0) target = $region13
  $region12: #{unet_forward.1} parent=0 // pred_region
    _
  $region13: #{unet_forward.1} parent=0 // pred_fallthru
    _
  // Predicated region
  $region14: #{unet_forward.1} parent=0 // pred_check
    _
  $region15: #{unet_forward.1} parent=0 // pred_check_branch
    %33 = sbr.rel (0) target = $region17
  $region16: #{unet_forward.1} parent=0 // pred_region
    _
  $region17: #{unet_forward.1} parent=0 // pred_fallthru
    _
  // Predicated region
  $region18: #{unet_forward.1} parent=0 // pred_check
    _
  $region19: #{unet_forward.1} parent=0 // pred_check_branch
    %35 = sbr.rel (0) target = $region21
  $region20: #{unet_forward.1} parent=0 // pred_region
    _
  $region21: #{unet_forward.1} parent=0 // pred_fallthru
    _
  // Predicated region
  $region22: #{unet_forward.1} parent=0 // pred_check
    _
  $region23: #{unet_forward.1} parent=0 // pred_check_branch
    %37 = sbr.rel (0) target = $region25
  $region24: #{unet_forward.1} parent=0 // pred_region
    _
  $region25: #{unet_forward.1} parent=0 // pred_fallthru
    _
  // Predicated region
  $region26: #{unet_forward.1} parent=0 // pred_check
    _
  $region27: #{unet_forward.1} parent=0 // pred_check_branch
    %39 = sbr.rel (0) target = $region29
  $region28: #{unet_forward.1} parent=0 // pred_region
    _
  $region29: #{unet_forward.1} parent=0 // pred_fallthru
    _
  // Predicated region
  $region30: #{unet_forward.1} parent=0 // pred_check
    _
  $region31: #{unet_forward.1} parent=0 // pred_check_branch
    %41 = sbr.rel (0) target = $region33
  $region32: #{unet_forward.1} parent=0 // pred_region
    _
  $region33: #{unet_forward.1} parent=0 // pred_fallthru
    _
  // Predicated region
  $region34: #{unet_forward.1} parent=0 // pred_check
    _
  $region35: #{unet_forward.1} parent=0 // pred_check_branch
    %43 = sbr.rel (0) target = $region37
  $region36: #{unet_forward.1} parent=0 // pred_region
    _
  $region37: #{unet_forward.1} parent=0 // pred_fallthru
    _
  // Predicated region
  $region38: #{unet_forward.1} parent=0 // pred_check
    _
  $region39: #{unet_forward.1} parent=0 // pred_check_branch
    %45 = sbr.rel (0) target = $region41
  $region40: #{unet_forward.1} parent=0 // pred_region
    _
  $region41: #{unet_forward.1} parent=0 // pred_fallthru
    _
  // Predicated region
  $region42: #{unet_forward.1} parent=0 // pred_check
    _
  $region43: #{unet_forward.1} parent=0 // pred_check_branch
    %47 = sbr.rel (0) target = $region45
  $region44: #{unet_forward.1} parent=0 // pred_region
    _
  $region45: #{unet_forward.1} parent=0 // pred_fallthru
    _
  // Predicated region
  $region46: #{unet_forward.1} parent=0 // pred_check
    _
  $region47: #{unet_forward.1} parent=0 // pred_check_branch
    %49 = sbr.rel (0) target = $region49
  $region48: #{unet_forward.1} parent=0 // pred_region
    _
  $region49: #{unet_forward.1} parent=0 // pred_fallthru
    _
  // Predicated region
  $region50: #{unet_forward.1} parent=0 // pred_check
    _
  $region51: #{unet_forward.1} parent=0 // pred_check_branch
    %51 = sbr.rel (0) target = $region53
  $region52: #{unet_forward.1} parent=0 // pred_region
    _
  $region53: #{unet_forward.1} parent=0 // pred_fallthru
    _
  // Predicated region
  $region54: #{unet_forward.1} parent=0 // pred_check
    _
  $region55: #{unet_forward.1} parent=0 // pred_check_branch
    %53 = sbr.rel (0) target = $region57
  $region56: #{unet_forward.1} parent=0 // pred_region
    _
  $region57: #{unet_forward.1} parent=0 // pred_fallthru
    _
  // Predicated region
  $region58: #{unet_forward.1} parent=0 // pred_check
    _
  $region59: #{unet_forward.1} parent=0 // pred_check_branch
    %55 = sbr.rel (0) target = $region61
  $region60: #{unet_forward.1} parent=0 // pred_region
    _
  $region61: #{unet_forward.1} parent=0 // pred_fallthru
    _
  // Predicated region
  $region62: #{unet_forward.1} parent=0 // pred_check
    _
  $region63: #{unet_forward.1} parent=0 // pred_check_branch
    %57 = sbr.rel (0) target = $region65
  $region64: #{unet_forward.1} parent=0 // pred_region
    _
  $region65: #{unet_forward.1} parent=0 // pred_fallthru
    _
  // Predicated region
  $region66: #{unet_forward.1} parent=0 // pred_check
    _
  $region67: #{unet_forward.1} parent=0 // pred_check_branch
    %59 = sbr.rel (0) target = $region69
  $region68: #{unet_forward.1} parent=0 // pred_region
    _
  $region69: #{unet_forward.1} parent=0 // pred_fallthru
    _
  // Predicated region
  $region70: #{unet_forward.1} parent=0 // pred_check
    _
  $region71: #{unet_forward.1} parent=0 // pred_check_branch
    %61 = sbr.rel (0) target = $region73
  $region72: #{unet_forward.1} parent=0 // pred_region
    _
  $region73: #{unet_forward.1} parent=0 // pred_fallthru
    _
  // Predicated region
  $region74: #{unet_forward.1} parent=0 // pred_check
    _
  $region75: #{unet_forward.1} parent=0 // pred_check_branch
    %63 = sbr.rel (0) target = $region77
  $region76: #{unet_forward.1} parent=0 // pred_region
    _
  $region77: #{unet_forward.1} parent=0 // pred_fallthru
    _
  // Predicated region
  $region78: #{unet_forward.1} parent=0 // pred_check
    _
  $region79: #{unet_forward.1} parent=0 // pred_check_branch
    %65 = sbr.rel (0) target = $region81
  $region80: #{unet_forward.1} parent=0 // pred_region
    _
  $region81: #{unet_forward.1} parent=0 // pred_fallthru
    _
  // Predicated region
  $region82: #{unet_forward.1} parent=0 // pred_check
    _
  $region83: #{unet_forward.1} parent=0 // pred_check_branch
    %67 = sbr.rel (0) target = $region85
  $region84: #{unet_forward.1} parent=0 // pred_region
    _
  $region85: #{unet_forward.1} parent=0 // pred_fallthru
    _
  %v69 = vld [vmem:[%s0] sm:$0xff]
  %v70 = vld [vmem:[%s0 + $0x8] sm:$0xff]
  %v71 = vld [vmem:[%s0 + $0x10] sm:$0xff]
  %v72 = vld [vmem:[%s0 + $0x18] sm:$0xff]
  %v73 = vld [vmem:[%s15] sm:$0xff]
  %v74 = vld [vmem:[%s15 + $0x8] sm:$0xff]
  %v75 = vld [vmem:[%s15 + $0x10] sm:$0xff]
  %v76 = vld [vmem:[%s15 + $0x18] sm:$0xff]
  %v77 = vld [vmem:[%s15 + $0x20] sm:$0x1]
  %v78 = vld [vmem:[%s15 + $0x28] sm:$0x1]
  %v79 = vld [vmem:[%s15 + $0x30] sm:$0x1]
  %v80 = vld [vmem:[%s15 + $0x38] sm:$0x1]
  %81 = vrot.lane.b32.xlu0 %v69, 17
  %v82 = vpop.permute.xlu0 %81
  %83 = vrot.lane.b32.xlu0 %v70, 17
  %v84 = vpop.permute.xlu0 %83
  %85 = vrot.lane.b32.xlu0 %v71, 17
  %v86 = vpop.permute.xlu0 %85
  %87 = vrot.lane.b32.xlu0 %v72, 17
  %v88 = vpop.permute.xlu0 %87
  %v89 = vlaneseq
  %v90 = vand.u32 %v89, 127
  %vm91 = vcmp.lt.s32.totalorder %v90, 17
  %v92 = vsel %vm91, %v86, %v88
  %v93 = vsel %vm91, %v84, %v86
  %v94 = vsel %vm91, %v82, %v84
  %v95 = vsel %vm91, %v88, %v82
  %v96 = vlaneseq
  %v97 = vshrl.u32 %v96, 7
  %v98 = vsub.s32 0, %v97
  %v99 = vrot.slane %v73, %v98
  %v100 = vlaneseq
  %v101 = vshrl.u32 %v100, 7
  %v102 = vsub.s32 0, %v101
  %v103 = vrot.slane %v74, %v102
  %v104 = vlaneseq
  %v105 = vshrl.u32 %v104, 7
  %v106 = vsub.s32 0, %v105
  %v107 = vrot.slane %v75, %v106
  %v108 = vlaneseq
  %v109 = vshrl.u32 %v108, 7
  %v110 = vsub.s32 0, %v109
  %v111 = vrot.slane %v76, %v110
  %v112 = vmul.f32 %v95, %v99
  %v113 = vmul.f32 %v94, %v103
  %v114 = vmul.f32 %v93, %v107
  %v115 = vmul.f32 %v92, %v111
  %116 = vrot.lane.b32.xlu0 %v69, 16
  %v117 = vpop.permute.xlu0 %116
  %118 = vrot.lane.b32.xlu0 %v70, 16
  %v119 = vpop.permute.xlu0 %118
  %120 = vrot.lane.b32.xlu0 %v71, 16
  %v121 = vpop.permute.xlu0 %120
  %122 = vrot.lane.b32.xlu0 %v72, 16
  %v123 = vpop.permute.xlu0 %122
  %vm124 = vcmp.lt.s32.totalorder %v90, 16
  %v125 = vsel %vm124, %v121, %v123
  %v126 = vsel %vm124, %v119, %v121
  %v127 = vsel %vm124, %v117, %v119
  %v128 = vsel %vm124, %v123, %v117
  %v129 = vlaneseq
  %v130 = vshrl.u32 %v129, 7
  %v131 = vsub.s32 1, %v130
  %v132 = vrot.slane %v73, %v131
  %v133 = vlaneseq
  %v134 = vshrl.u32 %v133, 7
  %v135 = vsub.s32 1, %v134
  %v136 = vrot.slane %v74, %v135
  %v137 = vlaneseq
  %v138 = vshrl.u32 %v137, 7
  %v139 = vsub.s32 1, %v138
  %v140 = vrot.slane %v75, %v139
  %v141 = vlaneseq
  %v142 = vshrl.u32 %v141, 7
  %v143 = vsub.s32 1, %v142
  %v144 = vrot.slane %v76, %v143
  %v145 = vmul.f32 %v128, %v132
  %v146 = vmul.f32 %v127, %v136
  %v147 = vmul.f32 %v126, %v140
  %v148 = vmul.f32 %v125, %v144
  %149 = vrot.lane.b32.xlu0 %v69, 15
  %v150 = vpop.permute.xlu0 %149
  %151 = vrot.lane.b32.xlu0 %v70, 15
  %v152 = vpop.permute.xlu0 %151
  %153 = vrot.lane.b32.xlu0 %v71, 15
  %v154 = vpop.permute.xlu0 %153
  %155 = vrot.lane.b32.xlu0 %v72, 15
  %v156 = vpop.permute.xlu0 %155
  %vm157 = vcmp.lt.s32.totalorder %v90, 15
  %v158 = vsel %vm157, %v154, %v156
  %v159 = vsel %vm157, %v152, %v154
  %v160 = vsel %vm157, %v150, %v152
  %v161 = vsel %vm157, %v156, %v150
  %v162 = vlaneseq
  %v163 = vshrl.u32 %v162, 7
  %v164 = vsub.s32 2, %v163
  %v165 = vrot.slane %v73, %v164
  %v166 = vlaneseq
  %v167 = vshrl.u32 %v166, 7
  %v168 = vsub.s32 2, %v167
  %v169 = vrot.slane %v74, %v168
  %v170 = vlaneseq
  %v171 = vshrl.u32 %v170, 7
  %v172 = vsub.s32 2, %v171
  %v173 = vrot.slane %v75, %v172
  %v174 = vlaneseq
  %v175 = vshrl.u32 %v174, 7
  %v176 = vsub.s32 2, %v175
  %v177 = vrot.slane %v76, %v176
  %v178 = vmul.f32 %v161, %v165
  %v179 = vmul.f32 %v160, %v169
  %v180 = vmul.f32 %v159, %v173
  %v181 = vmul.f32 %v158, %v177
  %182 = vrot.lane.b32.xlu0 %v69, 1
  %v183 = vpop.permute.xlu0 %182
  %184 = vrot.lane.b32.xlu0 %v70, 1
  %v185 = vpop.permute.xlu0 %184
  %186 = vrot.lane.b32.xlu0 %v71, 1
  %v187 = vpop.permute.xlu0 %186
  %188 = vrot.lane.b32.xlu0 %v72, 1
  %v189 = vpop.permute.xlu0 %188
  %vm190 = vcmp.lt.s32.totalorder %v90, 1
  %v191 = vsel %vm190, %v187, %v189
  %v192 = vsel %vm190, %v185, %v187
  %v193 = vsel %vm190, %v183, %v185
  %v194 = vsel %vm190, %v189, %v183
  %v195 = vlaneseq
  %v196 = vshrl.u32 %v195, 7
  %v197 = vsub.s32 3, %v196
  %v198 = vrot.slane %v73, %v197
  %v199 = vlaneseq
  %v200 = vshrl.u32 %v199, 7
  %v201 = vsub.s32 3, %v200
  %v202 = vrot.slane %v74, %v201
  %v203 = vlaneseq
  %v204 = vshrl.u32 %v203, 7
  %v205 = vsub.s32 3, %v204
  %v206 = vrot.slane %v75, %v205
  %v207 = vlaneseq
  %v208 = vshrl.u32 %v207, 7
  %v209 = vsub.s32 3, %v208
  %v210 = vrot.slane %v76, %v209
  %v211 = vmul.f32 %v194, %v198
  %v212 = vmul.f32 %v193, %v202
  %v213 = vmul.f32 %v192, %v206
  %v214 = vmul.f32 %v191, %v210
  %215 = vrot.lane.b32.xlu0 %v69, 127
  %v216 = vpop.permute.xlu0 %215
  %217 = vrot.lane.b32.xlu0 %v70, 127
  %v218 = vpop.permute.xlu0 %217
  %219 = vrot.lane.b32.xlu0 %v71, 127
  %v220 = vpop.permute.xlu0 %219
  %221 = vrot.lane.b32.xlu0 %v72, 127
  %v222 = vpop.permute.xlu0 %221
  %vm223 = vcmp.lt.s32.totalorder %v90, 127
  %v224 = vsel %vm223, %v220, %v222
  %v225 = vsel %vm223, %v218, %v220
  %v226 = vsel %vm223, %v216, %v218
  %v227 = vsel %vm223, %v222, %v216
  %v228 = vlaneseq
  %v229 = vshrl.u32 %v228, 7
  %v230 = vsub.s32 5, %v229
  %v231 = vrot.slane %v73, %v230
  %v232 = vlaneseq
  %v233 = vshrl.u32 %v232, 7
  %v234 = vsub.s32 5, %v233
  %v235 = vrot.slane %v74, %v234
  %v236 = vlaneseq
  %v237 = vshrl.u32 %v236, 7
  %v238 = vsub.s32 5, %v237
  %v239 = vrot.slane %v75, %v238
  %v240 = vlaneseq
  %v241 = vshrl.u32 %v240, 7
  %v242 = vsub.s32 5, %v241
  %v243 = vrot.slane %v76, %v242
  %v244 = vmul.f32 %v226, %v231
  %v245 = vmul.f32 %v225, %v235
  %v246 = vmul.f32 %v224, %v239
  %v247 = vmul.f32 %v227, %v243
  %248 = vrot.lane.b32.xlu0 %v69, 113
  %v249 = vpop.permute.xlu0 %248
  %250 = vrot.lane.b32.xlu0 %v70, 113
  %v251 = vpop.permute.xlu0 %250
  %252 = vrot.lane.b32.xlu0 %v71, 113
  %v253 = vpop.permute.xlu0 %252
  %254 = vrot.lane.b32.xlu0 %v72, 113
  %v255 = vpop.permute.xlu0 %254
  %vm256 = vcmp.lt.s32.totalorder %v90, 113
  %v257 = vsel %vm256, %v253, %v255
  %v258 = vsel %vm256, %v251, %v253
  %v259 = vsel %vm256, %v249, %v251
  %v260 = vsel %vm256, %v255, %v249
  %v261 = vlaneseq
  %v262 = vshrl.u32 %v261, 7
  %v263 = vsub.s32 6, %v262
  %v264 = vrot.slane %v73, %v263
  %v265 = vlaneseq
  %v266 = vshrl.u32 %v265, 7
  %v267 = vsub.s32 6, %v266
  %v268 = vrot.slane %v74, %v267
  %v269 = vlaneseq
  %v270 = vshrl.u32 %v269, 7
  %v271 = vsub.s32 6, %v270
  %v272 = vrot.slane %v75, %v271
  %v273 = vlaneseq
  %v274 = vshrl.u32 %v273, 7
  %v275 = vsub.s32 6, %v274
  %v276 = vrot.slane %v76, %v275
  %v277 = vmul.f32 %v259, %v264
  %v278 = vmul.f32 %v258, %v268
  %v279 = vmul.f32 %v257, %v272
  %v280 = vmul.f32 %v260, %v276
  %281 = vrot.lane.b32.xlu0 %v69, 112
  %v282 = vpop.permute.xlu0 %281
  %283 = vrot.lane.b32.xlu0 %v70, 112
  %v284 = vpop.permute.xlu0 %283
  %285 = vrot.lane.b32.xlu0 %v71, 112
  %v286 = vpop.permute.xlu0 %285
  %287 = vrot.lane.b32.xlu0 %v72, 112
  %v288 = vpop.permute.xlu0 %287
  %vm289 = vcmp.lt.s32.totalorder %v90, 112
  %v290 = vsel %vm289, %v286, %v288
  %v291 = vsel %vm289, %v284, %v286
  %v292 = vsel %vm289, %v282, %v284
  %v293 = vsel %vm289, %v288, %v282
  %v294 = vlaneseq
  %v295 = vshrl.u32 %v294, 7
  %v296 = vsub.s32 7, %v295
  %v297 = vrot.slane %v73, %v296
  %v298 = vlaneseq
  %v299 = vshrl.u32 %v298, 7
  %v300 = vsub.s32 7, %v299
  %v301 = vrot.slane %v74, %v300
  %v302 = vlaneseq
  %v303 = vshrl.u32 %v302, 7
  %v304 = vsub.s32 7, %v303
  %v305 = vrot.slane %v75, %v304
  %v306 = vlaneseq
  %v307 = vshrl.u32 %v306, 7
  %v308 = vsub.s32 7, %v307
  %v309 = vrot.slane %v76, %v308
  %v310 = vmul.f32 %v292, %v297
  %v311 = vmul.f32 %v291, %v301
  %v312 = vmul.f32 %v290, %v305
  %v313 = vmul.f32 %v293, %v309
  %314 = vrot.lane.b32.xlu0 %v69, 111
  %v315 = vpop.permute.xlu0 %314
  %316 = vrot.lane.b32.xlu0 %v70, 111
  %v317 = vpop.permute.xlu0 %316
  %318 = vrot.lane.b32.xlu0 %v71, 111
  %v319 = vpop.permute.xlu0 %318
  %320 = vrot.lane.b32.xlu0 %v72, 111
  %v321 = vpop.permute.xlu0 %320
  %vm322 = vcmp.lt.s32.totalorder %v90, 111
  %v323 = vsel %vm322, %v319, %v321
  %v324 = vsel %vm322, %v317, %v319
  %v325 = vsel %vm322, %v315, %v317
  %v326 = vsel %vm322, %v321, %v315
  %v327 = vlaneseq
  %v328 = vshrl.u32 %v327, 7
  %v329 = vsub.s32 0, %v328
  %v330 = vrot.slane %v77, %v329
  %v331 = vlaneseq
  %v332 = vshrl.u32 %v331, 7
  %v333 = vsub.s32 0, %v332
  %v334 = vrot.slane %v78, %v333
  %v335 = vlaneseq
  %v336 = vshrl.u32 %v335, 7
  %v337 = vsub.s32 0, %v336
  %v338 = vrot.slane %v79, %v337
  %v339 = vlaneseq
  %v340 = vshrl.u32 %v339, 7
  %v341 = vsub.s32 0, %v340
  %v342 = vrot.slane %v80, %v341
  %v343 = vmul.f32 %v325, %v330
  %v344 = vmul.f32 %v324, %v334
  %v345 = vmul.f32 %v323, %v338
  %v346 = vmul.f32 %v326, %v342
  %v347 = vpack.c.bf16 %v145, %v112
  %v348 = vpack.c.bf16 %v146, %v113
  %v349 = vpack.c.bf16 %v147, %v114
  %v350 = vpack.c.bf16 %v148, %v115
  %v351 = vpack.c.bf16 %v211, %v178
  %v352 = vpack.c.bf16 %v212, %v179
  %v353 = vpack.c.bf16 %v213, %v180
  %v354 = vpack.c.bf16 %v214, %v181
  %v355 = vpack.c.bf16 %v244, %v69
  %v356 = vpack.c.bf16 %v245, %v70
  %v357 = vpack.c.bf16 %v246, %v71
  %v358 = vpack.c.bf16 %v247, %v72
  %v359 = vpack.c.bf16 %v310, %v277
  %v360 = vpack.c.bf16 %v311, %v278
  %v361 = vpack.c.bf16 %v312, %v279
  %v362 = vpack.c.bf16 %v313, %v280
  %v363 = vpack.c.bf16 %v343, %v343
  %v364 = vpack.c.bf16 %v344, %v344
  %v365 = vpack.c.bf16 %v345, %v345
  %v366 = vpack.c.bf16 %v346, %v346
  %v367 = vld [vmem:[%s1] sm:$0xf]
  %v368 = vld [vmem:[%s2] sm:$0xff]
  %370 = vset.pattern.permute.xlu0 0
  %371 = vperm.xlu0 %370, %v368
  %v372 = vpop.permute.xlu0 %371
  %vm374 = vcmask 588800
  %v376 = vsel %vm374, %v367, 0
  %vm378 = vcmask 1043456
  %v380 = vsel %vm378, %v363, 0
  %v383 = vsel %vm378, %v364, 0
  %v386 = vsel %vm378, %v365, 0
  %v389 = vsel %vm378, %v366, 0
  %391 = vmatprep.subr.bf16.mxu0 %v348
  %392 = vmatpush1.bf16.msra.mxu0 %v347
  %393 = vmatprep.subr.bf16.mxu0 %v352
  %394 = vmatpush1.bf16.msra.mxu0 %v351
  %395 = vmatprep.subr.bf16.mxu0 %v356
  %396 = vmatpush1.bf16.msra.mxu0 %v355
  %397 = vmatprep.subr.bf16.mxu0 %v360
  %398 = vmatpush1.bf16.msra.mxu0 %v359
  %399 = vmatprep.subr.bf16.mxu0 %v383
  %400 = vmatpush1.bf16.msra.mxu0 %v380
  %401 = vmatprep.subr.bf16.mxu0 0
  %402 = vmatpush1.bf16.msra.mxu0 0
  %403 = vmatprep.subr.bf16.mxu0 0
  %404 = vmatpush1.bf16.msra.mxu0 0
  %405 = vmatprep.subr.bf16.mxu0 0
  %406 = vmatpush1.bf16.msra.mxu0 0
  %407 = vmatprep.subr.bf16.mxu0 0
  %408 = vmatpush1.bf16.msra.mxu0 0
  %409 = vmatprep.subr.bf16.mxu0 0
  %410 = vmatpush1.bf16.msra.mxu0 0
  %411 = vmatprep.subr.bf16.mxu0 0
  %412 = vmatpush1.bf16.msra.mxu0 0
  %413 = vmatprep.subr.bf16.mxu0 0
  %414 = vmatpush1.bf16.msra.mxu0 0
  %415 = vmatprep.subr.bf16.mxu0 0
  %416 = vmatpush1.bf16.msra.mxu0 0
  %417 = vmatprep.subr.bf16.mxu0 0
  %418 = vmatpush1.bf16.msra.mxu0 0
  %419 = vmatprep.subr.bf16.mxu0 0
  %420 = vmatpush1.bf16.msra.mxu0 0
  %421 = vmatprep.subr.bf16.mxu0 0
  %422 = vmatpush1.bf16.msra.mxu0 0
  %423 = vmatprep.mubr.bf16.mxu0 0
  %424 = vmatmul.mubr.bf16.gmra.mrb[0].mxu0 %v376
  %v425 = vpop.f32.mrb[0].mxu0
  %v426 = vadd.f32 %v372, %v425
  %v427 = vpop.f32.mrb[0].mxu0
  %v428 = vadd.f32 %v372, %v427
  %v429 = vpop.f32.mrb[0].mxu0
  %v430 = vpop.f32.mrb[0].mxu0
  %431 = vdwg.mxu0
  %432 = vmatprep.subr.bf16.mxu0 %v350
  %433 = vmatpush1.bf16.msra.mxu0 %v349
  %434 = vmatprep.subr.bf16.mxu0 %v354
  %435 = vmatpush1.bf16.msra.mxu0 %v353
  %436 = vmatprep.subr.bf16.mxu0 %v358
  %437 = vmatpush1.bf16.msra.mxu0 %v357
  %438 = vmatprep.subr.bf16.mxu0 %v362
  %439 = vmatpush1.bf16.msra.mxu0 %v361
  %440 = vmatprep.subr.bf16.mxu0 %v389
  %441 = vmatpush1.bf16.msra.mxu0 %v386
  %442 = vmatprep.subr.bf16.mxu0 0
  %443 = vmatpush1.bf16.msra.mxu0 0
  %444 = vmatprep.subr.bf16.mxu0 0
  %445 = vmatpush1.bf16.msra.mxu0 0
  %446 = vmatprep.subr.bf16.mxu0 0
  %447 = vmatpush1.bf16.msra.mxu0 0
  %448 = vmatprep.subr.bf16.mxu0 0
  %449 = vmatpush1.bf16.msra.mxu0 0
  %450 = vmatprep.subr.bf16.mxu0 0
  %451 = vmatpush1.bf16.msra.mxu0 0
  %452 = vmatprep.subr.bf16.mxu0 0
  %453 = vmatpush1.bf16.msra.mxu0 0
  %454 = vmatprep.subr.bf16.mxu0 0
  %455 = vmatpush1.bf16.msra.mxu0 0
  %456 = vmatprep.subr.bf16.mxu0 0
  %457 = vmatpush1.bf16.msra.mxu0 0
  %458 = vmatprep.subr.bf16.mxu0 0
  %459 = vmatpush1.bf16.msra.mxu0 0
  %460 = vmatprep.subr.bf16.mxu0 0
  %461 = vmatpush1.bf16.msra.mxu0 0
  %462 = vmatprep.subr.bf16.mxu0 0
  %463 = vmatpush1.bf16.msra.mxu0 0
  %464 = vmatprep.mubr.bf16.mxu0 0
  %465 = vmatmul.mubr.bf16.gmra.mrb[0].mxu0 %v376
  %v466 = vpop.f32.mrb[0].mxu0
  %v467 = vadd.f32 %v372, %v466
  %v468 = vpop.f32.mrb[0].mxu0
  %v469 = vadd.f32 %v372, %v468
  %v470 = vpop.f32.mrb[0].mxu0
  %v471 = vpop.f32.mrb[0].mxu0
  %472 = vdwg.mxu0
  %v473 = vmax.f32 %v426, 0.0
  %v474 = vmax.f32 %v428, 0.0
  %v475 = vmax.f32 %v467, 0.0
  %v476 = vmax.f32 %v469, 0.0
  %477 = vrot.lane.b32.xlu0 %v473, 17
  %v478 = vpop.permute.xlu0 %477
  %479 = vrot.lane.b32.xlu0 %v474, 17
  %v480 = vpop.permute.xlu0 %479
  %481 = vrot.lane.b32.xlu0 %v475, 17
  %v482 = vpop.permute.xlu0 %481
  %483 = vrot.lane.b32.xlu0 %v476, 17
  %v484 = vpop.permute.xlu0 %483
  %v485 = vsel %vm91, %v482, %v484
  %v486 = vsel %vm91, %v480, %v482
  %v487 = vsel %vm91, %v478, %v480
  %v488 = vsel %vm91, %v484, %v478
  %v489 = vmul.f32 %v488, %v99
  %v490 = vmul.f32 %v487, %v103
  %v491 = vmul.f32 %v486, %v107
  %v492 = vmul.f32 %v485, %v111
  %493 = vrot.lane.b32.xlu0 %v473, 16
  %v494 = vpop.permute.xlu0 %493
  %495 = vrot.lane.b32.xlu0 %v474, 16
  %v496 = vpop.permute.xlu0 %495
  %497 = vrot.lane.b32.xlu0 %v475, 16
  %v498 = vpop.permute.xlu0 %497
  %499 = vrot.lane.b32.xlu0 %v476, 16
  %v500 = vpop.permute.xlu0 %499
  %v501 = vsel %vm124, %v498, %v500
  %v502 = vsel %vm124, %v496, %v498
  %v503 = vsel %vm124, %v494, %v496
  %v504 = vsel %vm124, %v500, %v494
  %v505 = vmul.f32 %v504, %v132
  %v506 = vmul.f32 %v503, %v136
  %v507 = vmul.f32 %v502, %v140
  %v508 = vmul.f32 %v501, %v144
  %509 = vrot.lane.b32.xlu0 %v473, 15
  %v510 = vpop.permute.xlu0 %509
  %511 = vrot.lane.b32.xlu0 %v474, 15
  %v512 = vpop.permute.xlu0 %511
  %513 = vrot.lane.b32.xlu0 %v475, 15
  %v514 = vpop.permute.xlu0 %513
  %515 = vrot.lane.b32.xlu0 %v476, 15
  %v516 = vpop.permute.xlu0 %515
  %v517 = vsel %vm157, %v514, %v516
  %v518 = vsel %vm157, %v512, %v514
  %v519 = vsel %vm157, %v510, %v512
  %v520 = vsel %vm157, %v516, %v510
  %v521 = vmul.f32 %v520, %v165
  %v522 = vmul.f32 %v519, %v169
  %v523 = vmul.f32 %v518, %v173
  %v524 = vmul.f32 %v517, %v177
  %525 = vrot.lane.b32.xlu0 %v473, 1
  %v526 = vpop.permute.xlu0 %525
  %527 = vrot.lane.b32.xlu0 %v474, 1
  %v528 = vpop.permute.xlu0 %527
  %529 = vrot.lane.b32.xlu0 %v475, 1
  %v530 = vpop.permute.xlu0 %529
  %531 = vrot.lane.b32.xlu0 %v476, 1
  %v532 = vpop.permute.xlu0 %531
  %v533 = vsel %vm190, %v530, %v532
  %v534 = vsel %vm190, %v528, %v530
  %v535 = vsel %vm190, %v526, %v528
  %v536 = vsel %vm190, %v532, %v526
  %v537 = vmul.f32 %v536, %v198
  %v538 = vmul.f32 %v535, %v202
  %v539 = vmul.f32 %v534, %v206
  %v540 = vmul.f32 %v533, %v210
  %541 = vrot.lane.b32.xlu0 %v473, 127
  %v542 = vpop.permute.xlu0 %541
  %543 = vrot.lane.b32.xlu0 %v474, 127
  %v544 = vpop.permute.xlu0 %543
  %545 = vrot.lane.b32.xlu0 %v475, 127
  %v546 = vpop.permute.xlu0 %545
  %547 = vrot.lane.b32.xlu0 %v476, 127
  %v548 = vpop.permute.xlu0 %547
  %v549 = vsel %vm223, %v546, %v548
  %v550 = vsel %vm223, %v544, %v546
  %v551 = vsel %vm223, %v542, %v544
  %v552 = vsel %vm223, %v548, %v542
  %v553 = vmul.f32 %v551, %v231
  %v554 = vmul.f32 %v550, %v235
  %v555 = vmul.f32 %v549, %v239
  %v556 = vmul.f32 %v552, %v243
  %557 = vrot.lane.b32.xlu0 %v473, 113
  %v558 = vpop.permute.xlu0 %557
  %559 = vrot.lane.b32.xlu0 %v474, 113
  %v560 = vpop.permute.xlu0 %559
  %561 = vrot.lane.b32.xlu0 %v475, 113
  %v562 = vpop.permute.xlu0 %561
  %563 = vrot.lane.b32.xlu0 %v476, 113
  %v564 = vpop.permute.xlu0 %563
  %v565 = vsel %vm256, %v562, %v564
  %v566 = vsel %vm256, %v560, %v562
  %v567 = vsel %vm256, %v558, %v560
  %v568 = vsel %vm256, %v564, %v558
  %v569 = vmul.f32 %v567, %v264
  %v570 = vmul.f32 %v566, %v268
  %v571 = vmul.f32 %v565, %v272
  %v572 = vmul.f32 %v568, %v276
  %573 = vrot.lane.b32.xlu0 %v473, 112
  %v574 = vpop.permute.xlu0 %573
  %575 = vrot.lane.b32.xlu0 %v474, 112
  %v576 = vpop.permute.xlu0 %575
  %577 = vrot.lane.b32.xlu0 %v475, 112
  %v578 = vpop.permute.xlu0 %577
  %579 = vrot.lane.b32.xlu0 %v476, 112
  %v580 = vpop.permute.xlu0 %579
  %v581 = vsel %vm289, %v578, %v580
  %v582 = vsel %vm289, %v576, %v578
  %v583 = vsel %vm289, %v574, %v576
  %v584 = vsel %vm289, %v580, %v574
  %v585 = vmul.f32 %v583, %v297
  %v586 = vmul.f32 %v582, %v301
  %v587 = vmul.f32 %v581, %v305
  %v588 = vmul.f32 %v584, %v309
  %589 = vrot.lane.b32.xlu0 %v473, 111
  %v590 = vpop.permute.xlu0 %589
  %591 = vrot.lane.b32.xlu0 %v474, 111
  %v592 = vpop.permute.xlu0 %591
  %593 = vrot.lane.b32.xlu0 %v475, 111
  %v594 = vpop.permute.xlu0 %593
  %595 = vrot.lane.b32.xlu0 %v476, 111
  %v596 = vpop.permute.xlu0 %595
  %v597 = vsel %vm322, %v594, %v596
  %v598 = vsel %vm322, %v592, %v594
  %v599 = vsel %vm322, %v590, %v592
  %v600 = vsel %vm322, %v596, %v590
  %v601 = vmul.f32 %v599, %v330
  %v602 = vmul.f32 %v598, %v334
  %v603 = vmul.f32 %v597, %v338
  %v604 = vmul.f32 %v600, %v342
  %v605 = vpack.c.bf16 %v505, %v489
  %v606 = vpack.c.bf16 %v506, %v490
  %v607 = vpack.c.bf16 %v507, %v491
  %v608 = vpack.c.bf16 %v508, %v492
  %v609 = vpack.c.bf16 %v537, %v521
  %v610 = vpack.c.bf16 %v538, %v522
  %v611 = vpack.c.bf16 %v539, %v523
  %v612 = vpack.c.bf16 %v540, %v524
  %v613 = vpack.c.bf16 %v553, %v473
  %v614 = vpack.c.bf16 %v554, %v474
  %v615 = vpack.c.bf16 %v555, %v475
  %v616 = vpack.c.bf16 %v556, %v476
  %v617 = vpack.c.bf16 %v585, %v569
  %v618 = vpack.c.bf16 %v586, %v570
  %v619 = vpack.c.bf16 %v587, %v571
  %v620 = vpack.c.bf16 %v588, %v572
  %v621 = vpack.c.bf16 %v601, %v601
  %v622 = vpack.c.bf16 %v602, %v602
  %v623 = vpack.c.bf16 %v603, %v603
  %v624 = vpack.c.bf16 %v604, %v604
  %v625 = vld [vmem:[%s3] sm:$0xf]
  %v626 = vld [vmem:[%s4] sm:$0xff]
  %628 = vset.pattern.permute.xlu0 0
  %629 = vperm.xlu0 %628, %v626
  %v630 = vpop.permute.xlu0 %629
  %v633 = vsel %vm374, %v625, 0
  %v636 = vsel %vm378, %v621, 0
  %v639 = vsel %vm378, %v622, 0
  %v642 = vsel %vm378, %v623, 0
  %v645 = vsel %vm378, %v624, 0
  %647 = vmatprep.subr.bf16.mxu0 %v606
  %648 = vmatpush1.bf16.msra.mxu0 %v605
  %649 = vmatprep.subr.bf16.mxu0 %v610
  %650 = vmatpush1.bf16.msra.mxu0 %v609
  %651 = vmatprep.subr.bf16.mxu0 %v614
  %652 = vmatpush1.bf16.msra.mxu0 %v613
  %653 = vmatprep.subr.bf16.mxu0 %v618
  %654 = vmatpush1.bf16.msra.mxu0 %v617
  %655 = vmatprep.subr.bf16.mxu0 %v639
  %656 = vmatpush1.bf16.msra.mxu0 %v636
  %657 = vmatprep.subr.bf16.mxu0 0
  %658 = vmatpush1.bf16.msra.mxu0 0
  %659 = vmatprep.subr.bf16.mxu0 0
  %660 = vmatpush1.bf16.msra.mxu0 0
  %661 = vmatprep.subr.bf16.mxu0 0
  %662 = vmatpush1.bf16.msra.mxu0 0
  %663 = vmatprep.subr.bf16.mxu0 0
  %664 = vmatpush1.bf16.msra.mxu0 0
  %665 = vmatprep.subr.bf16.mxu0 0
  %666 = vmatpush1.bf16.msra.mxu0 0
  %667 = vmatprep.subr.bf16.mxu0 0
  %668 = vmatpush1.bf16.msra.mxu0 0
  %669 = vmatprep.subr.bf16.mxu0 0
  %670 = vmatpush1.bf16.msra.mxu0 0
  %671 = vmatprep.subr.bf16.mxu0 0
  %672 = vmatpush1.bf16.msra.mxu0 0
  %673 = vmatprep.subr.bf16.mxu0 0
  %674 = vmatpush1.bf16.msra.mxu0 0
  %675 = vmatprep.subr.bf16.mxu0 0
  %676 = vmatpush1.bf16.msra.mxu0 0
  %677 = vmatprep.subr.bf16.mxu0 0
  %678 = vmatpush1.bf16.msra.mxu0 0
  %679 = vmatprep.mubr.bf16.mxu0 0
  %680 = vmatmul.mubr.bf16.gmra.mrb[0].mxu0 %v633
  %v681 = vpop.f32.mrb[0].mxu0
  %v682 = vadd.f32 %v630, %v681
  %v683 = vpop.f32.mrb[0].mxu0
  %v684 = vadd.f32 %v630, %v683
  %v685 = vpop.f32.mrb[0].mxu0
  %v686 = vpop.f32.mrb[0].mxu0
  %687 = vdwg.mxu0
  %688 = vmatprep.subr.bf16.mxu0 %v608
  %689 = vmatpush1.bf16.msra.mxu0 %v607
  %690 = vmatprep.subr.bf16.mxu0 %v612
  %691 = vmatpush1.bf16.msra.mxu0 %v611
  %692 = vmatprep.subr.bf16.mxu0 %v616
  %693 = vmatpush1.bf16.msra.mxu0 %v615
  %694 = vmatprep.subr.bf16.mxu0 %v620
  %695 = vmatpush1.bf16.msra.mxu0 %v619
  %696 = vmatprep.subr.bf16.mxu0 %v645
  %697 = vmatpush1.bf16.msra.mxu0 %v642
  %698 = vmatprep.subr.bf16.mxu0 0
  %699 = vmatpush1.bf16.msra.mxu0 0
  %700 = vmatprep.subr.bf16.mxu0 0
  %701 = vmatpush1.bf16.msra.mxu0 0
  %702 = vmatprep.subr.bf16.mxu0 0
  %703 = vmatpush1.bf16.msra.mxu0 0
  %704 = vmatprep.subr.bf16.mxu0 0
  %705 = vmatpush1.bf16.msra.mxu0 0
  %706 = vmatprep.subr.bf16.mxu0 0
  %707 = vmatpush1.bf16.msra.mxu0 0
  %708 = vmatprep.subr.bf16.mxu0 0
  %709 = vmatpush1.bf16.msra.mxu0 0
  %710 = vmatprep.subr.bf16.mxu0 0
  %711 = vmatpush1.bf16.msra.mxu0 0
  %712 = vmatprep.subr.bf16.mxu0 0
  %713 = vmatpush1.bf16.msra.mxu0 0
  %714 = vmatprep.subr.bf16.mxu0 0
  %715 = vmatpush1.bf16.msra.mxu0 0
  %716 = vmatprep.subr.bf16.mxu0 0
  %717 = vmatpush1.bf16.msra.mxu0 0
  %718 = vmatprep.subr.bf16.mxu0 0
  %719 = vmatpush1.bf16.msra.mxu0 0
  %720 = vmatprep.mubr.bf16.mxu0 0
  %721 = vmatmul.mubr.bf16.gmra.mrb[0].mxu0 %v633
  %v722 = vpop.f32.mrb[0].mxu0
  %v723 = vadd.f32 %v630, %v722
  %v724 = vpop.f32.mrb[0].mxu0
  %v725 = vadd.f32 %v630, %v724
  %v726 = vpop.f32.mrb[0].mxu0
  %v727 = vpop.f32.mrb[0].mxu0
  %728 = vdwg.mxu0
  %v729 = vmax.f32 %v682, 0.0
  %v730 = vmax.f32 %v684, 0.0
  %v731 = vmax.f32 %v723, 0.0
  %v732 = vmax.f32 %v725, 0.0
  %733 = vrot.lane.b32.xlu0 %v729, 127
  %v734 = vpop.permute.xlu0 %733
  %735 = vrot.lane.b32.xlu0 %v730, 127
  %v736 = vpop.permute.xlu0 %735
  %737 = vrot.lane.b32.xlu0 %v731, 127
  %v738 = vpop.permute.xlu0 %737
  %739 = vrot.lane.b32.xlu0 %v732, 127
  %v740 = vpop.permute.xlu0 %739
  %v741 = vsel %vm223, %v738, %v740
  %v742 = vsel %vm223, %v736, %v738
  %v743 = vsel %vm223, %v734, %v736
  %v744 = vsel %vm223, %v740, %v734
  %v745 = vmax.f32 %v729, %v743
  %v746 = vmax.f32 %v730, %v742
  %v747 = vmax.f32 %v731, %v741
  %v748 = vmax.f32 %v732, %v744
  %749 = vrot.lane.b32.xlu0 %v745, 112
  %v750 = vpop.permute.xlu0 %749
  %751 = vrot.lane.b32.xlu0 %v746, 112
  %v752 = vpop.permute.xlu0 %751
  %753 = vrot.lane.b32.xlu0 %v747, 112
  %v754 = vpop.permute.xlu0 %753
  %755 = vrot.lane.b32.xlu0 %v748, 112
  %v756 = vpop.permute.xlu0 %755
  %v757 = vsel %vm289, %v754, %v756
  %v758 = vsel %vm289, %v752, %v754
  %v759 = vsel %vm289, %v750, %v752
  %v760 = vsel %vm289, %v756, %v750
  %v761 = vmax.f32 %v745, %v759
  %v762 = vmax.f32 %v746, %v758
  %v763 = vmax.f32 %v747, %v757
  %v764 = vmax.f32 %v748, %v760
  %v765 = vpack.c.bf16 %v761, %v761
  %v766 = vpack.c.bf16 %v762, %v762
  %v767 = vpack.c.bf16 %v763, %v763
  %v768 = vpack.c.bf16 %v764, %v764
  %v769 = vld [vmem:[%s17] sm:$0xf]
  %v770 = vld [vmem:[%s17 + $0x4] sm:$0xf]
  %v771 = vld [vmem:[%s17 + $0x8] sm:$0xf]
  %v772 = vld [vmem:[%s17 + $0xc] sm:$0xf]
  %v773 = vld [vmem:[%s17 + $0x10] sm:$0xf]
  %v774 = vld [vmem:[%s17 + $0x14] sm:$0xf]
  %v775 = vld [vmem:[%s17 + $0x18] sm:$0xf]
  %v776 = vld [vmem:[%s17 + $0x1c] sm:$0xf]
  %v777 = vld [vmem:[%s17 + $0x20] sm:$0xf]
  %v778 = vld [vmem:[%s17 + $0x24] sm:$0xf]
  %v779 = vld [vmem:[%s17 + $0x28] sm:$0xf]
  %v780 = vld [vmem:[%s17 + $0x2c] sm:$0xf]
  %v781 = vld [vmem:[%s17 + $0x30] sm:$0xf]
  %v782 = vld [vmem:[%s17 + $0x34] sm:$0xf]
  %v783 = vld [vmem:[%s17 + $0x38] sm:$0xf]
  %v784 = vld [vmem:[%s17 + $0x3c] sm:$0xf]
  %v785 = vld [vmem:[%s17 + $0x40] sm:$0xf]
  %v786 = vld [vmem:[%s17 + $0x44] sm:$0xf]
  %v787 = vld [vmem:[%s17 + $0x48] sm:$0xf]
  %v788 = vld [vmem:[%s17 + $0x4c] sm:$0xf]
  %v789 = vld [vmem:[%s17 + $0x50] sm:$0xf]
  %v790 = vld [vmem:[%s17 + $0x54] sm:$0xf]
  %v791 = vld [vmem:[%s17 + $0x58] sm:$0xf]
  %v792 = vld [vmem:[%s17 + $0x5c] sm:$0xf]
  %v793 = vld [vmem:[%s17 + $0x60] sm:$0xf]
  %v794 = vld [vmem:[%s17 + $0x64] sm:$0xf]
  %v795 = vld [vmem:[%s17 + $0x68] sm:$0xf]
  %v796 = vld [vmem:[%s17 + $0x6c] sm:$0xf]
  %v797 = vld [vmem:[%s17 + $0x70] sm:$0xf]
  %v798 = vld [vmem:[%s17 + $0x74] sm:$0xf]
  %v799 = vld [vmem:[%s17 + $0x78] sm:$0xf]
  %v800 = vld [vmem:[%s17 + $0x7c] sm:$0xf]
  %v801 = vld [vmem:[%s17 + $0x80] sm:$0xf]
  %v802 = vld [vmem:[%s17 + $0x84] sm:$0xf]
  %v803 = vld [vmem:[%s17 + $0x88] sm:$0xf]
  %v804 = vld [vmem:[%s17 + $0x8c] sm:$0xf]
  %v805 = vld [vmem:[%s17 + $0x90] sm:$0xf]
  %v806 = vld [vmem:[%s17 + $0x94] sm:$0xf]
  %v807 = vld [vmem:[%s17 + $0x98] sm:$0xf]
  %v808 = vld [vmem:[%s17 + $0x9c] sm:$0xf]
  %v809 = vld [vmem:[%s17 + $0xa0] sm:$0xf]
  %v810 = vld [vmem:[%s17 + $0xa4] sm:$0xf]
  %v811 = vld [vmem:[%s17 + $0xa8] sm:$0xf]
  %v812 = vld [vmem:[%s17 + $0xac] sm:$0xf]
  %v813 = vld [vmem:[%s17 + $0xb0] sm:$0xf]
  %v814 = vld [vmem:[%s17 + $0xb4] sm:$0xf]
  %v815 = vld [vmem:[%s17 + $0xb8] sm:$0xf]
  %v816 = vld [vmem:[%s17 + $0xbc] sm:$0xf]
  %v817 = vld [vmem:[%s17 + $0xc0] sm:$0xf]
  %v818 = vld [vmem:[%s17 + $0xc4] sm:$0xf]
  %v819 = vld [vmem:[%s17 + $0xc8] sm:$0xf]
  %v820 = vld [vmem:[%s17 + $0xcc] sm:$0xf]
  %v821 = vld [vmem:[%s17 + $0xd0] sm:$0xf]
  %v822 = vld [vmem:[%s17 + $0xd4] sm:$0xf]
  %v823 = vld [vmem:[%s17 + $0xd8] sm:$0xf]
  %v824 = vld [vmem:[%s17 + $0xdc] sm:$0xf]
  %v825 = vld [vmem:[%s17 + $0xe0] sm:$0xf]
  %v826 = vld [vmem:[%s17 + $0xe4] sm:$0xf]
  %v827 = vld [vmem:[%s17 + $0xe8] sm:$0xf]
  %v828 = vld [vmem:[%s17 + $0xec] sm:$0xf]
  %v829 = vld [vmem:[%s17 + $0xf0] sm:$0xf]
  %v830 = vld [vmem:[%s17 + $0xf4] sm:$0xf]
  %v831 = vld [vmem:[%s17 + $0xf8] sm:$0xf]
  %v832 = vld [vmem:[%s17 + $0xfc] sm:$0xf]
  %v897 = vunpack.c.l.b16 %v769
  %v898 = vunpack.c.l.b16 %v770
  %v899 = vunpack.c.l.b16 %v771
  %v900 = vunpack.c.l.b16 %v772
  %v901 = vunpack.c.l.b16 %v773
  %v902 = vunpack.c.l.b16 %v774
  %v903 = vunpack.c.l.b16 %v775
  %v904 = vunpack.c.l.b16 %v776
  %v905 = vunpack.c.l.b16 %v777
  %v906 = vunpack.c.l.b16 %v778
  %v907 = vunpack.c.l.b16 %v779
  %v908 = vunpack.c.l.b16 %v780
  %v909 = vunpack.c.l.b16 %v781
  %v910 = vunpack.c.l.b16 %v782
  %v911 = vunpack.c.l.b16 %v783
  %v912 = vunpack.c.l.b16 %v784
  %v913 = vunpack.c.l.b16 %v785
  %v914 = vunpack.c.l.b16 %v786
  %v915 = vunpack.c.l.b16 %v787
  %v916 = vunpack.c.l.b16 %v788
  %v917 = vunpack.c.l.b16 %v789
  %v918 = vunpack.c.l.b16 %v790
  %v919 = vunpack.c.l.b16 %v791
  %v920 = vunpack.c.l.b16 %v792
  %v921 = vunpack.c.l.b16 %v793
  %v922 = vunpack.c.l.b16 %v794
  %v923 = vunpack.c.l.b16 %v795
  %v924 = vunpack.c.l.b16 %v796
  %v925 = vunpack.c.l.b16 %v797
  %v926 = vunpack.c.l.b16 %v798
  %v927 = vunpack.c.l.b16 %v799
  %v928 = vunpack.c.l.b16 %v800
  %v929 = vunpack.c.l.b16 %v801
  %v930 = vunpack.c.l.b16 %v802
  %v931 = vunpack.c.l.b16 %v803
  %v932 = vunpack.c.l.b16 %v804
  %v933 = vunpack.c.l.b16 %v805
  %v934 = vunpack.c.l.b16 %v806
  %v935 = vunpack.c.l.b16 %v807
  %v936 = vunpack.c.l.b16 %v808
  %v937 = vunpack.c.l.b16 %v809
  %v938 = vunpack.c.l.b16 %v810
  %v939 = vunpack.c.l.b16 %v811
  %v940 = vunpack.c.l.b16 %v812
  %v941 = vunpack.c.l.b16 %v813
  %v942 = vunpack.c.l.b16 %v814
  %v943 = vunpack.c.l.b16 %v815
  %v944 = vunpack.c.l.b16 %v816
  %v945 = vunpack.c.l.b16 %v817
  %v946 = vunpack.c.l.b16 %v818
  %v947 = vunpack.c.l.b16 %v819
  %v948 = vunpack.c.l.b16 %v820
  %v949 = vunpack.c.l.b16 %v821
  %v950 = vunpack.c.l.b16 %v822
  %v951 = vunpack.c.l.b16 %v823
  %v952 = vunpack.c.l.b16 %v824
  %v953 = vunpack.c.l.b16 %v825
  %v954 = vunpack.c.l.b16 %v826
  %v955 = vunpack.c.l.b16 %v827
  %v956 = vunpack.c.l.b16 %v828
  %v957 = vunpack.c.l.b16 %v829
  %v958 = vunpack.c.l.b16 %v830
  %v959 = vunpack.c.l.b16 %v831
  %v960 = vunpack.c.l.b16 %v832
  %v961 = vpack.c.b16 %v898, %v897
  %v962 = vpack.c.b16 %v900, %v899
  %v963 = vpack.c.b16 %v902, %v901
  %v964 = vpack.c.b16 %v904, %v903
  %v965 = vpack.c.b16 %v906, %v905
  %v966 = vpack.c.b16 %v908, %v907
  %v967 = vpack.c.b16 %v910, %v909
  %v968 = vpack.c.b16 %v912, %v911
  %v969 = vpack.c.b16 %v914, %v913
  %v970 = vpack.c.b16 %v916, %v915
  %v971 = vpack.c.b16 %v918, %v917
  %v972 = vpack.c.b16 %v920, %v919
  %v973 = vpack.c.b16 %v922, %v921
  %v974 = vpack.c.b16 %v924, %v923
  %v975 = vpack.c.b16 %v926, %v925
  %v976 = vpack.c.b16 %v928, %v927
  %v977 = vpack.c.b16 %v930, %v929
  %v978 = vpack.c.b16 %v932, %v931
  %v979 = vpack.c.b16 %v934, %v933
  %v980 = vpack.c.b16 %v936, %v935
  %v981 = vpack.c.b16 %v938, %v937
  %v982 = vpack.c.b16 %v940, %v939
  %v983 = vpack.c.b16 %v942, %v941
  %v984 = vpack.c.b16 %v944, %v943
  %v985 = vpack.c.b16 %v946, %v945
  %v986 = vpack.c.b16 %v948, %v947
  %v987 = vpack.c.b16 %v950, %v949
  %v988 = vpack.c.b16 %v952, %v951
  %v989 = vpack.c.b16 %v954, %v953
  %v990 = vpack.c.b16 %v956, %v955
  %v991 = vpack.c.b16 %v958, %v957
  %v992 = vpack.c.b16 %v960, %v959
  %1025 = vmatprep.subr.bf16.mxu0 0
  %1026 = vmatpush1.bf16.msra.mxu0 %v961
  %1027 = vmatprep.subr.bf16.mxu0 0
  %1028 = vmatpush1.bf16.msra.mxu0 %v962
  %1029 = vmatprep.subr.bf16.mxu0 0
  %1030 = vmatpush1.bf16.msra.mxu0 %v963
  %1031 = vmatprep.subr.bf16.mxu0 0
  %1032 = vmatpush1.bf16.msra.mxu0 %v964
  %1033 = vmatprep.subr.bf16.mxu0 0
  %1034 = vmatpush1.bf16.msra.mxu0 %v965
  %1035 = vmatprep.subr.bf16.mxu0 0
  %1036 = vmatpush1.bf16.msra.mxu0 %v966
  %1037 = vmatprep.subr.bf16.mxu0 0
  %1038 = vmatpush1.bf16.msra.mxu0 %v967
  %1039 = vmatprep.subr.bf16.mxu0 0
  %1040 = vmatpush1.bf16.msra.mxu0 %v968
  %1041 = vmatprep.subr.bf16.mxu0 0
  %1042 = vmatpush1.bf16.msra.mxu0 %v969
  %1043 = vmatprep.subr.bf16.mxu0 0
  %1044 = vmatpush1.bf16.msra.mxu0 %v970
  %1045 = vmatprep.subr.bf16.mxu0 0
  %1046 = vmatpush1.bf16.msra.mxu0 %v971
  %1047 = vmatprep.subr.bf16.mxu0 0
  %1048 = vmatpush1.bf16.msra.mxu0 %v972
  %1049 = vmatprep.subr.bf16.mxu0 0
  %1050 = vmatpush1.bf16.msra.mxu0 %v973
  %1051 = vmatprep.subr.bf16.mxu0 0
  %1052 = vmatpush1.bf16.msra.mxu0 %v974
  %1053 = vmatprep.subr.bf16.mxu0 0
  %1054 = vmatpush1.bf16.msra.mxu0 %v975
  %1055 = vmatprep.subr.bf16.mxu0 0
  %1056 = vmatpush1.bf16.msra.mxu0 %v976
  %1057 = vmatprep.mubr.bf16.mxu0 %v766
  %1058 = vmatmul.mubr.bf16.gmra.mrb[0].mxu0 %v765
  %v1059 = vpop.f32.mrb[0].mxu0
  %v1060 = vadd.f32 0.0, %v1059
  %v1061 = vpop.f32.mrb[0].mxu0
  %v1062 = vpop.f32.mrb[0].mxu0
  %v1063 = vpop.f32.mrb[0].mxu0
  %1064 = vdwg.mxu0
  %1065 = vmatprep.subr.bf16.mxu0 0
  %1066 = vmatpush1.bf16.msra.mxu0 %v977
  %1067 = vmatprep.subr.bf16.mxu0 0
  %1068 = vmatpush1.bf16.msra.mxu0 %v978
  %1069 = vmatprep.subr.bf16.mxu0 0
  %1070 = vmatpush1.bf16.msra.mxu0 %v979
  %1071 = vmatprep.subr.bf16.mxu0 0
  %1072 = vmatpush1.bf16.msra.mxu0 %v980
  %1073 = vmatprep.subr.bf16.mxu0 0
  %1074 = vmatpush1.bf16.msra.mxu0 %v981
  %1075 = vmatprep.subr.bf16.mxu0 0
  %1076 = vmatpush1.bf16.msra.mxu0 %v982
  %1077 = vmatprep.subr.bf16.mxu0 0
  %1078 = vmatpush1.bf16.msra.mxu0 %v983
  %1079 = vmatprep.subr.bf16.mxu0 0
  %1080 = vmatpush1.bf16.msra.mxu0 %v984
  %1081 = vmatprep.subr.bf16.mxu0 0
  %1082 = vmatpush1.bf16.msra.mxu0 %v985
  %1083 = vmatprep.subr.bf16.mxu0 0
  %1084 = vmatpush1.bf16.msra.mxu0 %v986
  %1085 = vmatprep.subr.bf16.mxu0 0
  %1086 = vmatpush1.bf16.msra.mxu0 %v987
  %1087 = vmatprep.subr.bf16.mxu0 0
  %1088 = vmatpush1.bf16.msra.mxu0 %v988
  %1089 = vmatprep.subr.bf16.mxu0 0
  %1090 = vmatpush1.bf16.msra.mxu0 %v989
  %1091 = vmatprep.subr.bf16.mxu0 0
  %1092 = vmatpush1.bf16.msra.mxu0 %v990
  %1093 = vmatprep.subr.bf16.mxu0 0
  %1094 = vmatpush1.bf16.msra.mxu0 %v991
  %1095 = vmatprep.subr.bf16.mxu0 0
  %1096 = vmatpush1.bf16.msra.mxu0 %v992
  %1097 = vmatprep.mubr.bf16.mxu0 %v768
  %1098 = vmatmul.mubr.bf16.gmra.mrb[0].mxu0 %v767
  %v1099 = vpop.f32.mrb[0].mxu0
  %v1100 = vadd.f32 %v1060, %v1099
  %v1101 = vpop.f32.mrb[0].mxu0
  %v1102 = vpop.f32.mrb[0].mxu0
  %v1103 = vpop.f32.mrb[0].mxu0
  %1104 = vdwg.mxu0
  %v1105 = vld [vmem:[%s16] sm:$0xff]
  %v1106 = vld [vmem:[%s16 + $0x8] sm:$0x1]
  %1107 = vrot.lane.b32.xlu0 %v1100, 9
  %v1108 = vpop.permute.xlu0 %1107
  %v1109 = vlaneseq
  %v1110 = vshrl.u32 %v1109, 7
  %v1111 = vsub.s32 0, %v1110
  %v1112 = vrot.slane %v1105, %v1111
  %v1113 = vmul.f32 %v1108, %v1112
  %1114 = vrot.lane.b32.xlu0 %v1100, 8
  %v1115 = vpop.permute.xlu0 %1114
  %v1116 = vlaneseq
  %v1117 = vshrl.u32 %v1116, 7
  %v1118 = vsub.s32 1, %v1117
  %v1119 = vrot.slane %v1105, %v1118
  %v1120 = vmul.f32 %v1115, %v1119
  %1121 = vrot.lane.b32.xlu0 %v1100, 7
  %v1122 = vpop.permute.xlu0 %1121
  %v1123 = vlaneseq
  %v1124 = vshrl.u32 %v1123, 7
  %v1125 = vsub.s32 2, %v1124
  %v1126 = vrot.slane %v1105, %v1125
  %v1127 = vmul.f32 %v1122, %v1126
  %1128 = vrot.lane.b32.xlu0 %v1100, 1
  %v1129 = vpop.permute.xlu0 %1128
  %v1130 = vlaneseq
  %v1131 = vshrl.u32 %v1130, 7
  %v1132 = vsub.s32 3, %v1131
  %v1133 = vrot.slane %v1105, %v1132
  %v1134 = vmul.f32 %v1129, %v1133
  %1135 = vrot.lane.b32.xlu0 %v1100, 127
  %v1136 = vpop.permute.xlu0 %1135
  %v1137 = vlaneseq
  %v1138 = vshrl.u32 %v1137, 7
  %v1139 = vsub.s32 5, %v1138
  %v1140 = vrot.slane %v1105, %v1139
  %v1141 = vmul.f32 %v1136, %v1140
  %1142 = vrot.lane.b32.xlu0 %v1100, 121
  %v1143 = vpop.permute.xlu0 %1142
  %v1144 = vlaneseq
  %v1145 = vshrl.u32 %v1144, 7
  %v1146 = vsub.s32 6, %v1145
  %v1147 = vrot.slane %v1105, %v1146
  %v1148 = vmul.f32 %v1143, %v1147
  %1149 = vrot.lane.b32.xlu0 %v1100, 120
  %v1150 = vpop.permute.xlu0 %1149
  %v1151 = vlaneseq
  %v1152 = vshrl.u32 %v1151, 7
  %v1153 = vsub.s32 7, %v1152
  %v1154 = vrot.slane %v1105, %v1153
  %v1155 = vmul.f32 %v1150, %v1154
  %1156 = vrot.lane.b32.xlu0 %v1100, 119
  %v1157 = vpop.permute.xlu0 %1156
  %v1158 = vlaneseq
  %v1159 = vshrl.u32 %v1158, 7
  %v1160 = vsub.s32 0, %v1159
  %v1161 = vrot.slane %v1106, %v1160
  %v1162 = vmul.f32 %v1157, %v1161
  %v1163 = vpack.c.bf16 %v1120, %v1113
  %v1164 = vpack.c.bf16 %v1134, %v1127
  %v1165 = vpack.c.bf16 %v1141, %v1100
  %v1166 = vpack.c.bf16 %v1155, %v1148
  %v1167 = vpack.c.bf16 %v1162, %v1162
  %v1168 = vld [vmem:[%s5] sm:$0xf]
  %v1169 = vld [vmem:[%s5 + $0x4] sm:$0xf]
  %v1170 = vld [vmem:[%s6] sm:$0xff]
  %v1171 = vld [vmem:[%s6 + $0x8] sm:$0xff]
  %1173 = vset.pattern.permute.xlu0 0
  %1174 = vperm.xlu0 %1173, %v1170
  %v1175 = vpop.permute.xlu0 %1174
  %1178 = vset.pattern.permute.xlu0 0
  %1179 = vperm.xlu0 %1178, %v1171
  %v1180 = vpop.permute.xlu0 %1179
  %v1184 = vunpack.c.l.b16 %v1168
  %v1185 = vunpack.c.l.b16 %v1169
  %v1186 = vpack.c.b16 %v1185, %v1184
  %v1188 = vsel %vm374, %v1186, 0
  %v1191 = vsel %vm378, %v1167, 0
  %1193 = vmatprep.subr.bf16.mxu0 0
  %1194 = vmatpush1.bf16.msra.mxu0 %v1163
  %1195 = vmatprep.subr.bf16.mxu0 0
  %1196 = vmatpush1.bf16.msra.mxu0 %v1164
  %1197 = vmatprep.subr.bf16.mxu0 0
  %1198 = vmatpush1.bf16.msra.mxu0 %v1165
  %1199 = vmatprep.subr.bf16.mxu0 0
  %1200 = vmatpush1.bf16.msra.mxu0 %v1166
  %1201 = vmatprep.subr.bf16.mxu0 0
  %1202 = vmatpush1.bf16.msra.mxu0 %v1191
  %1203 = vmatprep.subr.bf16.mxu0 0
  %1204 = vmatpush1.bf16.msra.mxu0 0
  %1205 = vmatprep.subr.bf16.mxu0 0
  %1206 = vmatpush1.bf16.msra.mxu0 0
  %1207 = vmatprep.subr.bf16.mxu0 0
  %1208 = vmatpush1.bf16.msra.mxu0 0
  %1209 = vmatprep.subr.bf16.mxu0 0
  %1210 = vmatpush1.bf16.msra.mxu0 0
  %1211 = vmatprep.subr.bf16.mxu0 0
  %1212 = vmatpush1.bf16.msra.mxu0 0
  %1213 = vmatprep.subr.bf16.mxu0 0
  %1214 = vmatpush1.bf16.msra.mxu0 0
  %1215 = vmatprep.subr.bf16.mxu0 0
  %1216 = vmatpush1.bf16.msra.mxu0 0
  %1217 = vmatprep.subr.bf16.mxu0 0
  %1218 = vmatpush1.bf16.msra.mxu0 0
  %1219 = vmatprep.subr.bf16.mxu0 0
  %1220 = vmatpush1.bf16.msra.mxu0 0
  %1221 = vmatprep.subr.bf16.mxu0 0
  %1222 = vmatpush1.bf16.msra.mxu0 0
  %1223 = vmatprep.subr.bf16.mxu0 0
  %1224 = vmatpush1.bf16.msra.mxu0 0
  %1225 = vmatprep.mubr.bf16.mxu0 0
  %1226 = vmatmul.mubr.bf16.gmra.mrb[0].mxu0 %v1188
  %v1227 = vpop.f32.mrb[0].mxu0
  %v1228 = vadd.f32 %v1175, %v1227
  %v1229 = vpop.f32.mrb[0].mxu0
  %v1230 = vpop.f32.mrb[0].mxu0
  %v1231 = vadd.f32 %v1180, %v1230
  %v1232 = vpop.f32.mrb[0].mxu0
  %1233 = vdwg.mxu0
  %v1234 = vmax.f32 %v1228, 0.0
  %v1235 = vmax.f32 %v1231, 0.0
  %1236 = vrot.lane.b32.xlu0 %v1234, 9
  %v1237 = vpop.permute.xlu0 %1236
  %1238 = vrot.lane.b32.xlu0 %v1235, 9
  %v1239 = vpop.permute.xlu0 %1238
  %v1240 = vmul.f32 %v1237, %v1112
  %v1241 = vmul.f32 %v1239, %v1112
  %1242 = vrot.lane.b32.xlu0 %v1234, 8
  %v1243 = vpop.permute.xlu0 %1242
  %1244 = vrot.lane.b32.xlu0 %v1235, 8
  %v1245 = vpop.permute.xlu0 %1244
  %v1246 = vmul.f32 %v1243, %v1119
  %v1247 = vmul.f32 %v1245, %v1119
  %1248 = vrot.lane.b32.xlu0 %v1234, 7
  %v1249 = vpop.permute.xlu0 %1248
  %1250 = vrot.lane.b32.xlu0 %v1235, 7
  %v1251 = vpop.permute.xlu0 %1250
  %v1252 = vmul.f32 %v1249, %v1126
  %v1253 = vmul.f32 %v1251, %v1126
  %1254 = vrot.lane.b32.xlu0 %v1234, 1
  %v1255 = vpop.permute.xlu0 %1254
  %1256 = vrot.lane.b32.xlu0 %v1235, 1
  %v1257 = vpop.permute.xlu0 %1256
  %v1258 = vmul.f32 %v1255, %v1133
  %v1259 = vmul.f32 %v1257, %v1133
  %1260 = vrot.lane.b32.xlu0 %v1234, 127
  %v1261 = vpop.permute.xlu0 %1260
  %1262 = vrot.lane.b32.xlu0 %v1235, 127
  %v1263 = vpop.permute.xlu0 %1262
  %v1264 = vmul.f32 %v1261, %v1140
  %v1265 = vmul.f32 %v1263, %v1140
  %1266 = vrot.lane.b32.xlu0 %v1234, 121
  %v1267 = vpop.permute.xlu0 %1266
  %1268 = vrot.lane.b32.xlu0 %v1235, 121
  %v1269 = vpop.permute.xlu0 %1268
  %v1270 = vmul.f32 %v1267, %v1147
  %v1271 = vmul.f32 %v1269, %v1147
  %1272 = vrot.lane.b32.xlu0 %v1234, 120
  %v1273 = vpop.permute.xlu0 %1272
  %1274 = vrot.lane.b32.xlu0 %v1235, 120
  %v1275 = vpop.permute.xlu0 %1274
  %v1276 = vmul.f32 %v1273, %v1154
  %v1277 = vmul.f32 %v1275, %v1154
  %1278 = vrot.lane.b32.xlu0 %v1234, 119
  %v1279 = vpop.permute.xlu0 %1278
  %1280 = vrot.lane.b32.xlu0 %v1235, 119
  %v1281 = vpop.permute.xlu0 %1280
  %v1282 = vmul.f32 %v1279, %v1161
  %v1283 = vmul.f32 %v1281, %v1161
  %v1284 = vpack.c.bf16 %v1241, %v1240
  %v1285 = vpack.c.bf16 %v1247, %v1246
  %v1286 = vpack.c.bf16 %v1253, %v1252
  %v1287 = vpack.c.bf16 %v1259, %v1258
  %v1288 = vpack.c.bf16 %v1235, %v1234
  %v1289 = vpack.c.bf16 %v1265, %v1264
  %v1290 = vpack.c.bf16 %v1271, %v1270
  %v1291 = vpack.c.bf16 %v1277, %v1276
  %v1292 = vpack.c.bf16 %v1283, %v1282
  %v1293 = vld [vmem:[%s7] sm:$0xff]
  %v1294 = vld [vmem:[%s7 + $0x8] sm:$0xff]
  %v1295 = vld [vmem:[%s8] sm:$0xff]
  %v1296 = vld [vmem:[%s8 + $0x8] sm:$0xff]
  %1298 = vset.pattern.permute.xlu0 0
  %1299 = vperm.xlu0 %1298, %v1295
  %v1300 = vpop.permute.xlu0 %1299
  %1303 = vset.pattern.permute.xlu0 0
  %1304 = vperm.xlu0 %1303, %v1296
  %v1305 = vpop.permute.xlu0 %1304
  %v1309 = vunpack.c.l.b16 %v1293
  %v1310 = vunpack.c.h.b16 %v1293
  %v1311 = vunpack.c.l.b16 %v1294
  %v1312 = vunpack.c.h.b16 %v1294
  %v1313 = vpack.c.b16 %v1311, %v1309
  %v1314 = vpack.c.b16 %v1312, %v1310
  %vm1316 = vcmask 130048
  %v1318 = vsel %vm1316, %v1314, 0
  %1320 = vmatprep.subr.bf16.mxu0 0
  %1321 = vmatpush1.bf16.msra.mxu0 %v1284
  %1322 = vmatprep.subr.bf16.mxu0 0
  %1323 = vmatpush1.bf16.msra.mxu0 %v1285
  %1324 = vmatprep.subr.bf16.mxu0 0
  %1325 = vmatpush1.bf16.msra.mxu0 %v1286
  %1326 = vmatprep.subr.bf16.mxu0 0
  %1327 = vmatpush1.bf16.msra.mxu0 %v1287
  %1328 = vmatprep.subr.bf16.mxu0 0
  %1329 = vmatpush1.bf16.msra.mxu0 %v1288
  %1330 = vmatprep.subr.bf16.mxu0 0
  %1331 = vmatpush1.bf16.msra.mxu0 %v1289
  %1332 = vmatprep.subr.bf16.mxu0 0
  %1333 = vmatpush1.bf16.msra.mxu0 %v1290
  %1334 = vmatprep.subr.bf16.mxu0 0
  %1335 = vmatpush1.bf16.msra.mxu0 %v1291
  %1336 = vmatprep.subr.bf16.mxu0 0
  %1337 = vmatpush1.bf16.msra.mxu0 %v1292
  %1338 = vmatprep.subr.bf16.mxu0 0
  %1339 = vmatpush1.bf16.msra.mxu0 0
  %1340 = vmatprep.subr.bf16.mxu0 0
  %1341 = vmatpush1.bf16.msra.mxu0 0
  %1342 = vmatprep.subr.bf16.mxu0 0
  %1343 = vmatpush1.bf16.msra.mxu0 0
  %1344 = vmatprep.subr.bf16.mxu0 0
  %1345 = vmatpush1.bf16.msra.mxu0 0
  %1346 = vmatprep.subr.bf16.mxu0 0
  %1347 = vmatpush1.bf16.msra.mxu0 0
  %1348 = vmatprep.subr.bf16.mxu0 0
  %1349 = vmatpush1.bf16.msra.mxu0 0
  %1350 = vmatprep.subr.bf16.mxu0 0
  %1351 = vmatpush1.bf16.msra.mxu0 0
  %1352 = vmatprep.mubr.bf16.mxu0 %v1318
  %1353 = vmatmul.mubr.bf16.gmra.mrb[0].mxu0 %v1313
  %v1354 = vpop.f32.mrb[0].mxu0
  %v1355 = vadd.f32 %v1300, %v1354
  %v1356 = vpop.f32.mrb[0].mxu0
  %v1357 = vpop.f32.mrb[0].mxu0
  %v1358 = vadd.f32 %v1305, %v1357
  %v1359 = vpop.f32.mrb[0].mxu0
  %1360 = vdwg.mxu0
  %v1361 = vmax.f32 %v1355, 0.0
  %v1362 = vmax.f32 %v1358, 0.0
  %1363 = vrot.lane.b32.xlu0 %v1361, 127
  %v1364 = vpop.permute.xlu0 %1363
  %1365 = vrot.lane.b32.xlu0 %v1362, 127
  %v1366 = vpop.permute.xlu0 %1365
  %v1367 = vmax.f32 %v1361, %v1364
  %v1368 = vmax.f32 %v1362, %v1366
  %1369 = vrot.lane.b32.xlu0 %v1367, 120
  %v1370 = vpop.permute.xlu0 %1369
  %1371 = vrot.lane.b32.xlu0 %v1368, 120
  %v1372 = vpop.permute.xlu0 %1371
  %v1373 = vmax.f32 %v1367, %v1370
  %v1374 = vmax.f32 %v1368, %v1372
  %v1375 = vpack.c.bf16 %v1374, %v1373
  %v1376 = vld [vmem:[%s18] sm:$0xf]
  %v1377 = vld [vmem:[%s18 + $0x4] sm:$0xf]
  %v1378 = vld [vmem:[%s18 + $0x8] sm:$0xf]
  %v1379 = vld [vmem:[%s18 + $0xc] sm:$0xf]
  %v1380 = vld [vmem:[%s18 + $0x10] sm:$0xf]
  %v1381 = vld [vmem:[%s18 + $0x14] sm:$0xf]
  %v1382 = vld [vmem:[%s18 + $0x18] sm:$0xf]
  %v1383 = vld [vmem:[%s18 + $0x1c] sm:$0xf]
  %v1384 = vld [vmem:[%s18 + $0x20] sm:$0xf]
  %v1385 = vld [vmem:[%s18 + $0x24] sm:$0xf]
  %v1386 = vld [vmem:[%s18 + $0x28] sm:$0xf]
  %v1387 = vld [vmem:[%s18 + $0x2c] sm:$0xf]
  %v1388 = vld [vmem:[%s18 + $0x30] sm:$0xf]
  %v1389 = vld [vmem:[%s18 + $0x34] sm:$0xf]
  %v1390 = vld [vmem:[%s18 + $0x38] sm:$0xf]
  %v1391 = vld [vmem:[%s18 + $0x3c] sm:$0xf]
  %v1408 = vunpack.c.l.b16 %v1376
  %v1409 = vunpack.c.l.b16 %v1377
  %v1410 = vunpack.c.l.b16 %v1378
  %v1411 = vunpack.c.l.b16 %v1379
  %v1412 = vunpack.c.l.b16 %v1380
  %v1413 = vunpack.c.l.b16 %v1381
  %v1414 = vunpack.c.l.b16 %v1382
  %v1415 = vunpack.c.l.b16 %v1383
  %v1416 = vunpack.c.l.b16 %v1384
  %v1417 = vunpack.c.l.b16 %v1385
  %v1418 = vunpack.c.l.b16 %v1386
  %v1419 = vunpack.c.l.b16 %v1387
  %v1420 = vunpack.c.l.b16 %v1388
  %v1421 = vunpack.c.l.b16 %v1389
  %v1422 = vunpack.c.l.b16 %v1390
  %v1423 = vunpack.c.l.b16 %v1391
  %v1424 = vpack.c.b16 %v1409, %v1408
  %v1425 = vpack.c.b16 %v1411, %v1410
  %v1426 = vpack.c.b16 %v1413, %v1412
  %v1427 = vpack.c.b16 %v1415, %v1414
  %v1428 = vpack.c.b16 %v1417, %v1416
  %v1429 = vpack.c.b16 %v1419, %v1418
  %v1430 = vpack.c.b16 %v1421, %v1420
  %v1431 = vpack.c.b16 %v1423, %v1422
  %1440 = vmatprep.subr.bf16.mxu0 0
  %1441 = vmatpush1.bf16.msra.mxu0 %v1424
  %1442 = vmatprep.subr.bf16.mxu0 0
  %1443 = vmatpush1.bf16.msra.mxu0 %v1425
  %1444 = vmatprep.subr.bf16.mxu0 0
  %1445 = vmatpush1.bf16.msra.mxu0 %v1426
  %1446 = vmatprep.subr.bf16.mxu0 0
  %1447 = vmatpush1.bf16.msra.mxu0 %v1427
  %1448 = vmatprep.subr.bf16.mxu0 0
  %1449 = vmatpush1.bf16.msra.mxu0 %v1428
  %1450 = vmatprep.subr.bf16.mxu0 0
  %1451 = vmatpush1.bf16.msra.mxu0 %v1429
  %1452 = vmatprep.subr.bf16.mxu0 0
  %1453 = vmatpush1.bf16.msra.mxu0 %v1430
  %1454 = vmatprep.subr.bf16.mxu0 0
  %1455 = vmatpush1.bf16.msra.mxu0 %v1431
  %1456 = vmatprep.subr.bf16.mxu0 0
  %1457 = vmatpush1.bf16.msra.mxu0 0
  %1458 = vmatprep.subr.bf16.mxu0 0
  %1459 = vmatpush1.bf16.msra.mxu0 0
  %1460 = vmatprep.subr.bf16.mxu0 0
  %1461 = vmatpush1.bf16.msra.mxu0 0
  %1462 = vmatprep.subr.bf16.mxu0 0
  %1463 = vmatpush1.bf16.msra.mxu0 0
  %1464 = vmatprep.subr.bf16.mxu0 0
  %1465 = vmatpush1.bf16.msra.mxu0 0
  %1466 = vmatprep.subr.bf16.mxu0 0
  %1467 = vmatpush1.bf16.msra.mxu0 0
  %1468 = vmatprep.subr.bf16.mxu0 0
  %1469 = vmatpush1.bf16.msra.mxu0 0
  %1470 = vmatprep.subr.bf16.mxu0 0
  %1471 = vmatpush1.bf16.msra.mxu0 0
  %1472 = vmatprep.mubr.bf16.mxu0 0
  %1473 = vmatmul.mubr.bf16.gmra.mrb[0].mxu0 %v1375
  %v1474 = vpop.f32.mrb[0].mxu0
  %v1475 = vadd.f32 0.0, %v1474
  %v1476 = vpop.f32.mrb[0].mxu0
  %v1477 = vpop.f32.mrb[0].mxu0
  %v1478 = vadd.f32 0.0, %v1477
  %v1479 = vpop.f32.mrb[0].mxu0
  %1480 = vdwg.mxu0
  %v1481 = vpack.c.bf16 %v1478, %v1475
  %v1482 = vld [vmem:[%s19] sm:$0xf]
  %v1483 = vld [vmem:[%s19 + $0x4] sm:$0xf]
  %v1484 = vld [vmem:[%s19 + $0x8] sm:$0xf]
  %v1485 = vld [vmem:[%s19 + $0xc] sm:$0xf]
  %v1490 = vunpack.c.l.b16 %v1482
  %v1491 = vunpack.c.l.b16 %v1483
  %v1492 = vunpack.c.l.b16 %v1484
  %v1493 = vunpack.c.l.b16 %v1485
  %v1494 = vpack.c.b16 %v1491, %v1490
  %v1495 = vpack.c.b16 %v1493, %v1492
  %vm1498 = vcmask 261120
  %v1500 = vsel %vm1498, %v1481, 0
  %1502 = vmatprep.subr.bf16.mxu0 0
  %1503 = vmatpush1.bf16.msra.mxu0 %v1494
  %1504 = vmatprep.subr.bf16.mxu0 0
  %1505 = vmatpush1.bf16.msra.mxu0 %v1495
  %1506 = vmatprep.subr.bf16.mxu0 0
  %1507 = vmatpush1.bf16.msra.mxu0 0
  %1508 = vmatprep.subr.bf16.mxu0 0
  %1509 = vmatpush1.bf16.msra.mxu0 0
  %1510 = vmatprep.subr.bf16.mxu0 0
  %1511 = vmatpush1.bf16.msra.mxu0 0
  %1512 = vmatprep.subr.bf16.mxu0 0
  %1513 = vmatpush1.bf16.msra.mxu0 0
  %1514 = vmatprep.subr.bf16.mxu0 0
  %1515 = vmatpush1.bf16.msra.mxu0 0
  %1516 = vmatprep.subr.bf16.mxu0 0
  %1517 = vmatpush1.bf16.msra.mxu0 0
  %1518 = vmatprep.subr.bf16.mxu0 0
  %1519 = vmatpush1.bf16.msra.mxu0 0
  %1520 = vmatprep.subr.bf16.mxu0 0
  %1521 = vmatpush1.bf16.msra.mxu0 0
  %1522 = vmatprep.subr.bf16.mxu0 0
  %1523 = vmatpush1.bf16.msra.mxu0 0
  %1524 = vmatprep.subr.bf16.mxu0 0
  %1525 = vmatpush1.bf16.msra.mxu0 0
  %1526 = vmatprep.subr.bf16.mxu0 0
  %1527 = vmatpush1.bf16.msra.mxu0 0
  %1528 = vmatprep.subr.bf16.mxu0 0
  %1529 = vmatpush1.bf16.msra.mxu0 0
  %1530 = vmatprep.subr.bf16.mxu0 0
  %1531 = vmatpush1.bf16.msra.mxu0 0
  %1532 = vmatprep.subr.bf16.mxu0 0
  %1533 = vmatpush1.bf16.msra.mxu0 0
  %1534 = vmatprep.mubr.bf16.mxu0 0
  %1535 = vmatmul.mubr.bf16.gmra.mrb[0].mxu0 %v1500
  %v1536 = vpop.f32.mrb[0].mxu0
  %v1537 = vadd.f32 0.0, %v1536
  %v1538 = vpop.f32.mrb[0].mxu0
  %v1539 = vpop.f32.mrb[0].mxu0
  %v1540 = vadd.f32 0.0, %v1539
  %v1541 = vpop.f32.mrb[0].mxu0
  %1542 = vdwg.mxu0
  %1543 = vrot.lane.b32.xlu0 %v1537, 9
  %v1544 = vpop.permute.xlu0 %1543
  %1545 = vrot.lane.b32.xlu0 %v1540, 9
  %v1546 = vpop.permute.xlu0 %1545
  %v1547 = vmul.f32 %v1544, %v1112
  %v1548 = vmul.f32 %v1546, %v1112
  %1549 = vrot.lane.b32.xlu0 %v1537, 8
  %v1550 = vpop.permute.xlu0 %1549
  %1551 = vrot.lane.b32.xlu0 %v1540, 8
  %v1552 = vpop.permute.xlu0 %1551
  %v1553 = vmul.f32 %v1550, %v1119
  %v1554 = vmul.f32 %v1552, %v1119
  %1555 = vrot.lane.b32.xlu0 %v1537, 7
  %v1556 = vpop.permute.xlu0 %1555
  %1557 = vrot.lane.b32.xlu0 %v1540, 7
  %v1558 = vpop.permute.xlu0 %1557
  %v1559 = vmul.f32 %v1556, %v1126
  %v1560 = vmul.f32 %v1558, %v1126
  %1561 = vrot.lane.b32.xlu0 %v1537, 1
  %v1562 = vpop.permute.xlu0 %1561
  %1563 = vrot.lane.b32.xlu0 %v1540, 1
  %v1564 = vpop.permute.xlu0 %1563
  %v1565 = vmul.f32 %v1562, %v1133
  %v1566 = vmul.f32 %v1564, %v1133
  %1567 = vrot.lane.b32.xlu0 %v1537, 127
  %v1568 = vpop.permute.xlu0 %1567
  %1569 = vrot.lane.b32.xlu0 %v1540, 127
  %v1570 = vpop.permute.xlu0 %1569
  %v1571 = vmul.f32 %v1568, %v1140
  %v1572 = vmul.f32 %v1570, %v1140
  %1573 = vrot.lane.b32.xlu0 %v1537, 121
  %v1574 = vpop.permute.xlu0 %1573
  %1575 = vrot.lane.b32.xlu0 %v1540, 121
  %v1576 = vpop.permute.xlu0 %1575
  %v1577 = vmul.f32 %v1574, %v1147
  %v1578 = vmul.f32 %v1576, %v1147
  %1579 = vrot.lane.b32.xlu0 %v1537, 120
  %v1580 = vpop.permute.xlu0 %1579
  %1581 = vrot.lane.b32.xlu0 %v1540, 120
  %v1582 = vpop.permute.xlu0 %1581
  %v1583 = vmul.f32 %v1580, %v1154
  %v1584 = vmul.f32 %v1582, %v1154
  %1585 = vrot.lane.b32.xlu0 %v1537, 119
  %v1586 = vpop.permute.xlu0 %1585
  %1587 = vrot.lane.b32.xlu0 %v1540, 119
  %v1588 = vpop.permute.xlu0 %1587
  %v1589 = vmul.f32 %v1586, %v1161
  %v1590 = vmul.f32 %v1588, %v1161
  %v1591 = vpack.c.bf16 %v1548, %v1547
  %v1592 = vpack.c.bf16 %v1554, %v1553
  %v1593 = vpack.c.bf16 %v1560, %v1559
  %v1594 = vpack.c.bf16 %v1566, %v1565
  %v1595 = vpack.c.bf16 %v1540, %v1537
  %v1596 = vpack.c.bf16 %v1572, %v1571
  %v1597 = vpack.c.bf16 %v1578, %v1577
  %v1598 = vpack.c.bf16 %v1584, %v1583
  %v1599 = vpack.c.bf16 %v1590, %v1589
  %v1600 = vld [vmem:[%s9] sm:$0xff]
  %v1601 = vld [vmem:[%s10] sm:$0xff]
  %1603 = vset.pattern.permute.xlu0 0
  %1604 = vperm.xlu0 %1603, %v1601
  %v1605 = vpop.permute.xlu0 %1604
  %v1608 = vunpack.c.l.b16 %v1600
  %v1609 = vunpack.c.h.b16 %v1600
  %v1610 = vpack.c.b16 %v1608, %v1608
  %v1611 = vpack.c.b16 %v1609, %v1609
  %v1614 = vsel %vm1316, %v1611, 0
  %1616 = vmatprep.subr.bf16.mxu0 0
  %1617 = vmatpush1.bf16.msra.mxu0 %v1591
  %1618 = vmatprep.subr.bf16.mxu0 0
  %1619 = vmatpush1.bf16.msra.mxu0 %v1592
  %1620 = vmatprep.subr.bf16.mxu0 0
  %1621 = vmatpush1.bf16.msra.mxu0 %v1593
  %1622 = vmatprep.subr.bf16.mxu0 0
  %1623 = vmatpush1.bf16.msra.mxu0 %v1594
  %1624 = vmatprep.subr.bf16.mxu0 0
  %1625 = vmatpush1.bf16.msra.mxu0 %v1595
  %1626 = vmatprep.subr.bf16.mxu0 0
  %1627 = vmatpush1.bf16.msra.mxu0 %v1596
  %1628 = vmatprep.subr.bf16.mxu0 0
  %1629 = vmatpush1.bf16.msra.mxu0 %v1597
  %1630 = vmatprep.subr.bf16.mxu0 0
  %1631 = vmatpush1.bf16.msra.mxu0 %v1598
  %1632 = vmatprep.subr.bf16.mxu0 0
  %1633 = vmatpush1.bf16.msra.mxu0 %v1599
  %1634 = vmatprep.subr.bf16.mxu0 0
  %1635 = vmatpush1.bf16.msra.mxu0 0
  %1636 = vmatprep.subr.bf16.mxu0 0
  %1637 = vmatpush1.bf16.msra.mxu0 0
  %1638 = vmatprep.subr.bf16.mxu0 0
  %1639 = vmatpush1.bf16.msra.mxu0 0
  %1640 = vmatprep.subr.bf16.mxu0 0
  %1641 = vmatpush1.bf16.msra.mxu0 0
  %1642 = vmatprep.subr.bf16.mxu0 0
  %1643 = vmatpush1.bf16.msra.mxu0 0
  %1644 = vmatprep.subr.bf16.mxu0 0
  %1645 = vmatpush1.bf16.msra.mxu0 0
  %1646 = vmatprep.subr.bf16.mxu0 0
  %1647 = vmatpush1.bf16.msra.mxu0 0
  %1648 = vmatprep.mubr.bf16.mxu0 %v1614
  %1649 = vmatmul.mubr.bf16.gmra.mrb[0].mxu0 %v1610
  %v1650 = vpop.f32.mrb[0].mxu0
  %v1651 = vadd.f32 %v1605, %v1650
  %v1652 = vpop.f32.mrb[0].mxu0
  %v1653 = vpop.f32.mrb[0].mxu0
  %v1654 = vpop.f32.mrb[0].mxu0
  %1655 = vdwg.mxu0
  %v1656 = vmax.f32 %v1651, 0.0
  %v1657 = vpack.c.bf16 %v1656, %v1656
  %v1658 = vld [vmem:[%s20] sm:$0xff]
  %v1659 = vld [vmem:[%s20 + $0x8] sm:$0xff]
  %v1660 = vld [vmem:[%s20 + $0x10] sm:$0xff]
  %v1661 = vld [vmem:[%s20 + $0x18] sm:$0xff]
  %v1662 = vld [vmem:[%s20 + $0x20] sm:$0xff]
  %v1663 = vld [vmem:[%s20 + $0x28] sm:$0xff]
  %v1664 = vld [vmem:[%s20 + $0x30] sm:$0xff]
  %v1665 = vld [vmem:[%s20 + $0x38] sm:$0xff]
  %v1666 = vld [vmem:[%s20 + $0x40] sm:$0xff]
  %v1667 = vld [vmem:[%s20 + $0x48] sm:$0xff]
  %v1668 = vld [vmem:[%s20 + $0x50] sm:$0xff]
  %v1669 = vld [vmem:[%s20 + $0x58] sm:$0xff]
  %v1670 = vld [vmem:[%s20 + $0x60] sm:$0xff]
  %v1671 = vld [vmem:[%s20 + $0x68] sm:$0xff]
  %v1672 = vld [vmem:[%s20 + $0x70] sm:$0xff]
  %v1673 = vld [vmem:[%s20 + $0x78] sm:$0xff]
  %v1674 = vld [vmem:[%s20 + $0x80] sm:$0xff]
  %v1675 = vld [vmem:[%s20 + $0x88] sm:$0xff]
  %v1676 = vld [vmem:[%s20 + $0x90] sm:$0xff]
  %v1677 = vld [vmem:[%s20 + $0x98] sm:$0xff]
  %v1678 = vld [vmem:[%s20 + $0xa0] sm:$0xff]
  %v1679 = vld [vmem:[%s20 + $0xa8] sm:$0xff]
  %v1680 = vld [vmem:[%s20 + $0xb0] sm:$0xff]
  %v1681 = vld [vmem:[%s20 + $0xb8] sm:$0xff]
  %v1682 = vld [vmem:[%s20 + $0xc0] sm:$0xff]
  %v1683 = vld [vmem:[%s20 + $0xc8] sm:$0xff]
  %v1684 = vld [vmem:[%s20 + $0xd0] sm:$0xff]
  %v1685 = vld [vmem:[%s20 + $0xd8] sm:$0xff]
  %v1686 = vld [vmem:[%s20 + $0xe0] sm:$0xff]
  %v1687 = vld [vmem:[%s20 + $0xe8] sm:$0xff]
  %v1688 = vld [vmem:[%s20 + $0xf0] sm:$0xff]
  %v1689 = vld [vmem:[%s20 + $0xf8] sm:$0xff]
  %v1722 = vunpack.c.l.b16 %v1658
  %v1723 = vunpack.c.h.b16 %v1658
  %v1724 = vunpack.c.l.b16 %v1659
  %v1725 = vunpack.c.h.b16 %v1659
  %v1726 = vunpack.c.l.b16 %v1660
  %v1727 = vunpack.c.h.b16 %v1660
  %v1728 = vunpack.c.l.b16 %v1661
  %v1729 = vunpack.c.h.b16 %v1661
  %v1730 = vunpack.c.l.b16 %v1662
  %v1731 = vunpack.c.h.b16 %v1662
  %v1732 = vunpack.c.l.b16 %v1663
  %v1733 = vunpack.c.h.b16 %v1663
  %v1734 = vunpack.c.l.b16 %v1664
  %v1735 = vunpack.c.h.b16 %v1664
  %v1736 = vunpack.c.l.b16 %v1665
  %v1737 = vunpack.c.h.b16 %v1665
  %v1738 = vunpack.c.l.b16 %v1666
  %v1739 = vunpack.c.h.b16 %v1666
  %v1740 = vunpack.c.l.b16 %v1667
  %v1741 = vunpack.c.h.b16 %v1667
  %v1742 = vunpack.c.l.b16 %v1668
  %v1743 = vunpack.c.h.b16 %v1668
  %v1744 = vunpack.c.l.b16 %v1669
  %v1745 = vunpack.c.h.b16 %v1669
  %v1746 = vunpack.c.l.b16 %v1670
  %v1747 = vunpack.c.h.b16 %v1670
  %v1748 = vunpack.c.l.b16 %v1671
  %v1749 = vunpack.c.h.b16 %v1671
  %v1750 = vunpack.c.l.b16 %v1672
  %v1751 = vunpack.c.h.b16 %v1672
  %v1752 = vunpack.c.l.b16 %v1673
  %v1753 = vunpack.c.h.b16 %v1673
  %v1754 = vunpack.c.l.b16 %v1674
  %v1755 = vunpack.c.h.b16 %v1674
  %v1756 = vunpack.c.l.b16 %v1675
  %v1757 = vunpack.c.h.b16 %v1675
  %v1758 = vunpack.c.l.b16 %v1676
  %v1759 = vunpack.c.h.b16 %v1676
  %v1760 = vunpack.c.l.b16 %v1677
  %v1761 = vunpack.c.h.b16 %v1677
  %v1762 = vunpack.c.l.b16 %v1678
  %v1763 = vunpack.c.h.b16 %v1678
  %v1764 = vunpack.c.l.b16 %v1679
  %v1765 = vunpack.c.h.b16 %v1679
  %v1766 = vunpack.c.l.b16 %v1680
  %v1767 = vunpack.c.h.b16 %v1680
  %v1768 = vunpack.c.l.b16 %v1681
  %v1769 = vunpack.c.h.b16 %v1681
  %v1770 = vunpack.c.l.b16 %v1682
  %v1771 = vunpack.c.h.b16 %v1682
  %v1772 = vunpack.c.l.b16 %v1683
  %v1773 = vunpack.c.h.b16 %v1683
  %v1774 = vunpack.c.l.b16 %v1684
  %v1775 = vunpack.c.h.b16 %v1684
  %v1776 = vunpack.c.l.b16 %v1685
  %v1777 = vunpack.c.h.b16 %v1685
  %v1778 = vunpack.c.l.b16 %v1686
  %v1779 = vunpack.c.h.b16 %v1686
  %v1780 = vunpack.c.l.b16 %v1687
  %v1781 = vunpack.c.h.b16 %v1687
  %v1782 = vunpack.c.l.b16 %v1688
  %v1783 = vunpack.c.h.b16 %v1688
  %v1784 = vunpack.c.l.b16 %v1689
  %v1785 = vunpack.c.h.b16 %v1689
  %v1786 = vpack.c.b16 %v1726, %v1722
  %v1787 = vpack.c.b16 %v1727, %v1723
  %v1788 = vpack.c.b16 %v1728, %v1724
  %v1789 = vpack.c.b16 %v1729, %v1725
  %v1790 = vpack.c.b16 %v1734, %v1730
  %v1791 = vpack.c.b16 %v1735, %v1731
  %v1792 = vpack.c.b16 %v1736, %v1732
  %v1793 = vpack.c.b16 %v1737, %v1733
  %v1794 = vpack.c.b16 %v1742, %v1738
  %v1795 = vpack.c.b16 %v1743, %v1739
  %v1796 = vpack.c.b16 %v1744, %v1740
  %v1797 = vpack.c.b16 %v1745, %v1741
  %v1798 = vpack.c.b16 %v1750, %v1746
  %v1799 = vpack.c.b16 %v1751, %v1747
  %v1800 = vpack.c.b16 %v1752, %v1748
  %v1801 = vpack.c.b16 %v1753, %v1749
  %v1802 = vpack.c.b16 %v1758, %v1754
  %v1803 = vpack.c.b16 %v1759, %v1755
  %v1804 = vpack.c.b16 %v1760, %v1756
  %v1805 = vpack.c.b16 %v1761, %v1757
  %v1806 = vpack.c.b16 %v1766, %v1762
  %v1807 = vpack.c.b16 %v1767, %v1763
  %v1808 = vpack.c.b16 %v1768, %v1764
  %v1809 = vpack.c.b16 %v1769, %v1765
  %v1810 = vpack.c.b16 %v1774, %v1770
  %v1811 = vpack.c.b16 %v1775, %v1771
  %v1812 = vpack.c.b16 %v1776, %v1772
  %v1813 = vpack.c.b16 %v1777, %v1773
  %v1814 = vpack.c.b16 %v1782, %v1778
  %v1815 = vpack.c.b16 %v1783, %v1779
  %v1816 = vpack.c.b16 %v1784, %v1780
  %v1817 = vpack.c.b16 %v1785, %v1781
  %1850 = vmatprep.subr.bf16.mxu0 %v1787
  %1851 = vmatpush1.bf16.msra.mxu0 %v1786
  %1852 = vmatprep.subr.bf16.mxu0 %v1791
  %1853 = vmatpush1.bf16.msra.mxu0 %v1790
  %1854 = vmatprep.subr.bf16.mxu0 %v1795
  %1855 = vmatpush1.bf16.msra.mxu0 %v1794
  %1856 = vmatprep.subr.bf16.mxu0 %v1799
  %1857 = vmatpush1.bf16.msra.mxu0 %v1798
  %1858 = vmatprep.subr.bf16.mxu0 %v1803
  %1859 = vmatpush1.bf16.msra.mxu0 %v1802
  %1860 = vmatprep.subr.bf16.mxu0 %v1807
  %1861 = vmatpush1.bf16.msra.mxu0 %v1806
  %1862 = vmatprep.subr.bf16.mxu0 %v1811
  %1863 = vmatpush1.bf16.msra.mxu0 %v1810
  %1864 = vmatprep.subr.bf16.mxu0 %v1815
  %1865 = vmatpush1.bf16.msra.mxu0 %v1814
  %1866 = vmatprep.subr.bf16.mxu0 0
  %1867 = vmatpush1.bf16.msra.mxu0 0
  %1868 = vmatprep.subr.bf16.mxu0 0
  %1869 = vmatpush1.bf16.msra.mxu0 0
  %1870 = vmatprep.subr.bf16.mxu0 0
  %1871 = vmatpush1.bf16.msra.mxu0 0
  %1872 = vmatprep.subr.bf16.mxu0 0
  %1873 = vmatpush1.bf16.msra.mxu0 0
  %1874 = vmatprep.subr.bf16.mxu0 0
  %1875 = vmatpush1.bf16.msra.mxu0 0
  %1876 = vmatprep.subr.bf16.mxu0 0
  %1877 = vmatpush1.bf16.msra.mxu0 0
  %1878 = vmatprep.subr.bf16.mxu0 0
  %1879 = vmatpush1.bf16.msra.mxu0 0
  %1880 = vmatprep.subr.bf16.mxu0 0
  %1881 = vmatpush1.bf16.msra.mxu0 0
  %1882 = vmatprep.mubr.bf16.mxu0 0
  %1883 = vmatmul.mubr.bf16.gmra.mrb[0].mxu0 %v1657
  %v1884 = vpop.f32.mrb[0].mxu0
  %v1885 = vadd.f32 0.0, %v1884
  %v1886 = vpop.f32.mrb[0].mxu0
  %v1887 = vadd.f32 0.0, %v1886
  %v1888 = vpop.f32.mrb[0].mxu0
  %v1889 = vpop.f32.mrb[0].mxu0
  %1890 = vdwg.mxu0
  %1891 = vmatprep.subr.bf16.mxu0 %v1789
  %1892 = vmatpush1.bf16.msra.mxu0 %v1788
  %1893 = vmatprep.subr.bf16.mxu0 %v1793
  %1894 = vmatpush1.bf16.msra.mxu0 %v1792
  %1895 = vmatprep.subr.bf16.mxu0 %v1797
  %1896 = vmatpush1.bf16.msra.mxu0 %v1796
  %1897 = vmatprep.subr.bf16.mxu0 %v1801
  %1898 = vmatpush1.bf16.msra.mxu0 %v1800
  %1899 = vmatprep.subr.bf16.mxu0 %v1805
  %1900 = vmatpush1.bf16.msra.mxu0 %v1804
  %1901 = vmatprep.subr.bf16.mxu0 %v1809
  %1902 = vmatpush1.bf16.msra.mxu0 %v1808
  %1903 = vmatprep.subr.bf16.mxu0 %v1813
  %1904 = vmatpush1.bf16.msra.mxu0 %v1812
  %1905 = vmatprep.subr.bf16.mxu0 %v1817
  %1906 = vmatpush1.bf16.msra.mxu0 %v1816
  %1907 = vmatprep.subr.bf16.mxu0 0
  %1908 = vmatpush1.bf16.msra.mxu0 0
  %1909 = vmatprep.subr.bf16.mxu0 0
  %1910 = vmatpush1.bf16.msra.mxu0 0
  %1911 = vmatprep.subr.bf16.mxu0 0
  %1912 = vmatpush1.bf16.msra.mxu0 0
  %1913 = vmatprep.subr.bf16.mxu0 0
  %1914 = vmatpush1.bf16.msra.mxu0 0
  %1915 = vmatprep.subr.bf16.mxu0 0
  %1916 = vmatpush1.bf16.msra.mxu0 0
  %1917 = vmatprep.subr.bf16.mxu0 0
  %1918 = vmatpush1.bf16.msra.mxu0 0
  %1919 = vmatprep.subr.bf16.mxu0 0
  %1920 = vmatpush1.bf16.msra.mxu0 0
  %1921 = vmatprep.subr.bf16.mxu0 0
  %1922 = vmatpush1.bf16.msra.mxu0 0
  %1923 = vmatprep.mubr.bf16.mxu0 0
  %1924 = vmatmul.mubr.bf16.gmra.mrb[0].mxu0 %v1657
  %v1925 = vpop.f32.mrb[0].mxu0
  %v1926 = vadd.f32 0.0, %v1925
  %v1927 = vpop.f32.mrb[0].mxu0
  %v1928 = vadd.f32 0.0, %v1927
  %v1929 = vpop.f32.mrb[0].mxu0
  %v1930 = vpop.f32.mrb[0].mxu0
  %1931 = vdwg.mxu0
  %1932 = vrot.lane.b32.xlu0 %v1885, 17
  %v1933 = vpop.permute.xlu0 %1932
  %1934 = vrot.lane.b32.xlu0 %v1887, 17
  %v1935 = vpop.permute.xlu0 %1934
  %1936 = vrot.lane.b32.xlu0 %v1926, 17
  %v1937 = vpop.permute.xlu0 %1936
  %1938 = vrot.lane.b32.xlu0 %v1928, 17
  %v1939 = vpop.permute.xlu0 %1938
  %v1940 = vsel %vm91, %v1937, %v1939
  %v1941 = vsel %vm91, %v1935, %v1937
  %v1942 = vsel %vm91, %v1933, %v1935
  %v1943 = vsel %vm91, %v1939, %v1933
  %v1944 = vmul.f32 %v1943, %v99
  %v1945 = vmul.f32 %v1942, %v103
  %v1946 = vmul.f32 %v1941, %v107
  %v1947 = vmul.f32 %v1940, %v111
  %1948 = vrot.lane.b32.xlu0 %v1885, 16
  %v1949 = vpop.permute.xlu0 %1948
  %1950 = vrot.lane.b32.xlu0 %v1887, 16
  %v1951 = vpop.permute.xlu0 %1950
  %1952 = vrot.lane.b32.xlu0 %v1926, 16
  %v1953 = vpop.permute.xlu0 %1952
  %1954 = vrot.lane.b32.xlu0 %v1928, 16
  %v1955 = vpop.permute.xlu0 %1954
  %v1956 = vsel %vm124, %v1953, %v1955
  %v1957 = vsel %vm124, %v1951, %v1953
  %v1958 = vsel %vm124, %v1949, %v1951
  %v1959 = vsel %vm124, %v1955, %v1949
  %v1960 = vmul.f32 %v1959, %v132
  %v1961 = vmul.f32 %v1958, %v136
  %v1962 = vmul.f32 %v1957, %v140
  %v1963 = vmul.f32 %v1956, %v144
  %1964 = vrot.lane.b32.xlu0 %v1885, 15
  %v1965 = vpop.permute.xlu0 %1964
  %1966 = vrot.lane.b32.xlu0 %v1887, 15
  %v1967 = vpop.permute.xlu0 %1966
  %1968 = vrot.lane.b32.xlu0 %v1926, 15
  %v1969 = vpop.permute.xlu0 %1968
  %1970 = vrot.lane.b32.xlu0 %v1928, 15
  %v1971 = vpop.permute.xlu0 %1970
  %v1972 = vsel %vm157, %v1969, %v1971
  %v1973 = vsel %vm157, %v1967, %v1969
  %v1974 = vsel %vm157, %v1965, %v1967
  %v1975 = vsel %vm157, %v1971, %v1965
  %v1976 = vmul.f32 %v1975, %v165
  %v1977 = vmul.f32 %v1974, %v169
  %v1978 = vmul.f32 %v1973, %v173
  %v1979 = vmul.f32 %v1972, %v177
  %1980 = vrot.lane.b32.xlu0 %v1885, 1
  %v1981 = vpop.permute.xlu0 %1980
  %1982 = vrot.lane.b32.xlu0 %v1887, 1
  %v1983 = vpop.permute.xlu0 %1982
  %1984 = vrot.lane.b32.xlu0 %v1926, 1
  %v1985 = vpop.permute.xlu0 %1984
  %1986 = vrot.lane.b32.xlu0 %v1928, 1
  %v1987 = vpop.permute.xlu0 %1986
  %v1988 = vsel %vm190, %v1985, %v1987
  %v1989 = vsel %vm190, %v1983, %v1985
  %v1990 = vsel %vm190, %v1981, %v1983
  %v1991 = vsel %vm190, %v1987, %v1981
  %v1992 = vmul.f32 %v1991, %v198
  %v1993 = vmul.f32 %v1990, %v202
  %v1994 = vmul.f32 %v1989, %v206
  %v1995 = vmul.f32 %v1988, %v210
  %1996 = vrot.lane.b32.xlu0 %v1885, 127
  %v1997 = vpop.permute.xlu0 %1996
  %1998 = vrot.lane.b32.xlu0 %v1887, 127
  %v1999 = vpop.permute.xlu0 %1998
  %2000 = vrot.lane.b32.xlu0 %v1926, 127
  %v2001 = vpop.permute.xlu0 %2000
  %2002 = vrot.lane.b32.xlu0 %v1928, 127
  %v2003 = vpop.permute.xlu0 %2002
  %v2004 = vsel %vm223, %v2001, %v2003
  %v2005 = vsel %vm223, %v1999, %v2001
  %v2006 = vsel %vm223, %v1997, %v1999
  %v2007 = vsel %vm223, %v2003, %v1997
  %v2008 = vmul.f32 %v2006, %v231
  %v2009 = vmul.f32 %v2005, %v235
  %v2010 = vmul.f32 %v2004, %v239
  %v2011 = vmul.f32 %v2007, %v243
  %2012 = vrot.lane.b32.xlu0 %v1885, 113
  %v2013 = vpop.permute.xlu0 %2012
  %2014 = vrot.lane.b32.xlu0 %v1887, 113
  %v2015 = vpop.permute.xlu0 %2014
  %2016 = vrot.lane.b32.xlu0 %v1926, 113
  %v2017 = vpop.permute.xlu0 %2016
  %2018 = vrot.lane.b32.xlu0 %v1928, 113
  %v2019 = vpop.permute.xlu0 %2018
  %v2020 = vsel %vm256, %v2017, %v2019
  %v2021 = vsel %vm256, %v2015, %v2017
  %v2022 = vsel %vm256, %v2013, %v2015
  %v2023 = vsel %vm256, %v2019, %v2013
  %v2024 = vmul.f32 %v2022, %v264
  %v2025 = vmul.f32 %v2021, %v268
  %v2026 = vmul.f32 %v2020, %v272
  %v2027 = vmul.f32 %v2023, %v276
  %2028 = vrot.lane.b32.xlu0 %v1885, 112
  %v2029 = vpop.permute.xlu0 %2028
  %2030 = vrot.lane.b32.xlu0 %v1887, 112
  %v2031 = vpop.permute.xlu0 %2030
  %2032 = vrot.lane.b32.xlu0 %v1926, 112
  %v2033 = vpop.permute.xlu0 %2032
  %2034 = vrot.lane.b32.xlu0 %v1928, 112
  %v2035 = vpop.permute.xlu0 %2034
  %v2036 = vsel %vm289, %v2033, %v2035
  %v2037 = vsel %vm289, %v2031, %v2033
  %v2038 = vsel %vm289, %v2029, %v2031
  %v2039 = vsel %vm289, %v2035, %v2029
  %v2040 = vmul.f32 %v2038, %v297
  %v2041 = vmul.f32 %v2037, %v301
  %v2042 = vmul.f32 %v2036, %v305
  %v2043 = vmul.f32 %v2039, %v309
  %2044 = vrot.lane.b32.xlu0 %v1885, 111
  %v2045 = vpop.permute.xlu0 %2044
  %2046 = vrot.lane.b32.xlu0 %v1887, 111
  %v2047 = vpop.permute.xlu0 %2046
  %2048 = vrot.lane.b32.xlu0 %v1926, 111
  %v2049 = vpop.permute.xlu0 %2048
  %2050 = vrot.lane.b32.xlu0 %v1928, 111
  %v2051 = vpop.permute.xlu0 %2050
  %v2052 = vsel %vm322, %v2049, %v2051
  %v2053 = vsel %vm322, %v2047, %v2049
  %v2054 = vsel %vm322, %v2045, %v2047
  %v2055 = vsel %vm322, %v2051, %v2045
  %v2056 = vmul.f32 %v2054, %v330
  %v2057 = vmul.f32 %v2053, %v334
  %v2058 = vmul.f32 %v2052, %v338
  %v2059 = vmul.f32 %v2055, %v342
  %v2060 = vpack.c.bf16 %v1960, %v1944
  %v2061 = vpack.c.bf16 %v1961, %v1945
  %v2062 = vpack.c.bf16 %v1962, %v1946
  %v2063 = vpack.c.bf16 %v1963, %v1947
  %v2064 = vpack.c.bf16 %v1992, %v1976
  %v2065 = vpack.c.bf16 %v1993, %v1977
  %v2066 = vpack.c.bf16 %v1994, %v1978
  %v2067 = vpack.c.bf16 %v1995, %v1979
  %v2068 = vpack.c.bf16 %v2008, %v1885
  %v2069 = vpack.c.bf16 %v2009, %v1887
  %v2070 = vpack.c.bf16 %v2010, %v1926
  %v2071 = vpack.c.bf16 %v2011, %v1928
  %v2072 = vpack.c.bf16 %v2040, %v2024
  %v2073 = vpack.c.bf16 %v2041, %v2025
  %v2074 = vpack.c.bf16 %v2042, %v2026
  %v2075 = vpack.c.bf16 %v2043, %v2027
  %v2076 = vpack.c.bf16 %v2056, %v2056
  %v2077 = vpack.c.bf16 %v2057, %v2057
  %v2078 = vpack.c.bf16 %v2058, %v2058
  %v2079 = vpack.c.bf16 %v2059, %v2059
  %v2080 = vld [vmem:[%s11] sm:$0xf]
  %v2081 = vld [vmem:[%s12] sm:$0xff]
  %2083 = vset.pattern.permute.xlu0 0
  %2084 = vperm.xlu0 %2083, %v2081
  %v2085 = vpop.permute.xlu0 %2084
  %v2088 = vsel %vm374, %v2080, 0
  %v2091 = vsel %vm378, %v2076, 0
  %v2094 = vsel %vm378, %v2077, 0
  %v2097 = vsel %vm378, %v2078, 0
  %v2100 = vsel %vm378, %v2079, 0
  %2102 = vmatprep.subr.bf16.mxu0 %v2061
  %2103 = vmatpush1.bf16.msra.mxu0 %v2060
  %2104 = vmatprep.subr.bf16.mxu0 %v2065
  %2105 = vmatpush1.bf16.msra.mxu0 %v2064
  %2106 = vmatprep.subr.bf16.mxu0 %v2069
  %2107 = vmatpush1.bf16.msra.mxu0 %v2068
  %2108 = vmatprep.subr.bf16.mxu0 %v2073
  %2109 = vmatpush1.bf16.msra.mxu0 %v2072
  %2110 = vmatprep.subr.bf16.mxu0 %v2094
  %2111 = vmatpush1.bf16.msra.mxu0 %v2091
  %2112 = vmatprep.subr.bf16.mxu0 0
  %2113 = vmatpush1.bf16.msra.mxu0 0
  %2114 = vmatprep.subr.bf16.mxu0 0
  %2115 = vmatpush1.bf16.msra.mxu0 0
  %2116 = vmatprep.subr.bf16.mxu0 0
  %2117 = vmatpush1.bf16.msra.mxu0 0
  %2118 = vmatprep.subr.bf16.mxu0 0
  %2119 = vmatpush1.bf16.msra.mxu0 0
  %2120 = vmatprep.subr.bf16.mxu0 0
  %2121 = vmatpush1.bf16.msra.mxu0 0
  %2122 = vmatprep.subr.bf16.mxu0 0
  %2123 = vmatpush1.bf16.msra.mxu0 0
  %2124 = vmatprep.subr.bf16.mxu0 0
  %2125 = vmatpush1.bf16.msra.mxu0 0
  %2126 = vmatprep.subr.bf16.mxu0 0
  %2127 = vmatpush1.bf16.msra.mxu0 0
  %2128 = vmatprep.subr.bf16.mxu0 0
  %2129 = vmatpush1.bf16.msra.mxu0 0
  %2130 = vmatprep.subr.bf16.mxu0 0
  %2131 = vmatpush1.bf16.msra.mxu0 0
  %2132 = vmatprep.subr.bf16.mxu0 0
  %2133 = vmatpush1.bf16.msra.mxu0 0
  %2134 = vmatprep.mubr.bf16.mxu0 0
  %2135 = vmatmul.mubr.bf16.gmra.mrb[0].mxu0 %v2088
  %v2136 = vpop.f32.mrb[0].mxu0
  %v2137 = vadd.f32 %v2085, %v2136
  %v2138 = vpop.f32.mrb[0].mxu0
  %v2139 = vadd.f32 %v2085, %v2138
  %v2140 = vpop.f32.mrb[0].mxu0
  %v2141 = vpop.f32.mrb[0].mxu0
  %2142 = vdwg.mxu0
  %2143 = vmatprep.subr.bf16.mxu0 %v2063
  %2144 = vmatpush1.bf16.msra.mxu0 %v2062
  %2145 = vmatprep.subr.bf16.mxu0 %v2067
  %2146 = vmatpush1.bf16.msra.mxu0 %v2066
  %2147 = vmatprep.subr.bf16.mxu0 %v2071
  %2148 = vmatpush1.bf16.msra.mxu0 %v2070
  %2149 = vmatprep.subr.bf16.mxu0 %v2075
  %2150 = vmatpush1.bf16.msra.mxu0 %v2074
  %2151 = vmatprep.subr.bf16.mxu0 %v2100
  %2152 = vmatpush1.bf16.msra.mxu0 %v2097
  %2153 = vmatprep.subr.bf16.mxu0 0
  %2154 = vmatpush1.bf16.msra.mxu0 0
  %2155 = vmatprep.subr.bf16.mxu0 0
  %2156 = vmatpush1.bf16.msra.mxu0 0
  %2157 = vmatprep.subr.bf16.mxu0 0
  %2158 = vmatpush1.bf16.msra.mxu0 0
  %2159 = vmatprep.subr.bf16.mxu0 0
  %2160 = vmatpush1.bf16.msra.mxu0 0
  %2161 = vmatprep.subr.bf16.mxu0 0
  %2162 = vmatpush1.bf16.msra.mxu0 0
  %2163 = vmatprep.subr.bf16.mxu0 0
  %2164 = vmatpush1.bf16.msra.mxu0 0
  %2165 = vmatprep.subr.bf16.mxu0 0
  %2166 = vmatpush1.bf16.msra.mxu0 0
  %2167 = vmatprep.subr.bf16.mxu0 0
  %2168 = vmatpush1.bf16.msra.mxu0 0
  %2169 = vmatprep.subr.bf16.mxu0 0
  %2170 = vmatpush1.bf16.msra.mxu0 0
  %2171 = vmatprep.subr.bf16.mxu0 0
  %2172 = vmatpush1.bf16.msra.mxu0 0
  %2173 = vmatprep.subr.bf16.mxu0 0
  %2174 = vmatpush1.bf16.msra.mxu0 0
  %2175 = vmatprep.mubr.bf16.mxu0 0
  %2176 = vmatmul.mubr.bf16.gmra.mrb[0].mxu0 %v2088
  %v2177 = vpop.f32.mrb[0].mxu0
  %v2178 = vadd.f32 %v2085, %v2177
  %v2179 = vpop.f32.mrb[0].mxu0
  %v2180 = vadd.f32 %v2085, %v2179
  %v2181 = vpop.f32.mrb[0].mxu0
  %v2182 = vpop.f32.mrb[0].mxu0
  %2183 = vdwg.mxu0
  %v2184 = vmax.f32 %v2137, 0.0
  %v2185 = vmax.f32 %v2139, 0.0
  %v2186 = vmax.f32 %v2178, 0.0
  %v2187 = vmax.f32 %v2180, 0.0
  %2188 = vrot.lane.b32.xlu0 %v2184, 17
  %v2189 = vpop.permute.xlu0 %2188
  %2190 = vrot.lane.b32.xlu0 %v2185, 17
  %v2191 = vpop.permute.xlu0 %2190
  %2192 = vrot.lane.b32.xlu0 %v2186, 17
  %v2193 = vpop.permute.xlu0 %2192
  %2194 = vrot.lane.b32.xlu0 %v2187, 17
  %v2195 = vpop.permute.xlu0 %2194
  %v2196 = vsel %vm91, %v2193, %v2195
  %v2197 = vsel %vm91, %v2191, %v2193
  %v2198 = vsel %vm91, %v2189, %v2191
  %v2199 = vsel %vm91, %v2195, %v2189
  %v2200 = vmul.f32 %v2199, %v99
  %v2201 = vmul.f32 %v2198, %v103
  %v2202 = vmul.f32 %v2197, %v107
  %v2203 = vmul.f32 %v2196, %v111
  %2204 = vrot.lane.b32.xlu0 %v2184, 16
  %v2205 = vpop.permute.xlu0 %2204
  %2206 = vrot.lane.b32.xlu0 %v2185, 16
  %v2207 = vpop.permute.xlu0 %2206
  %2208 = vrot.lane.b32.xlu0 %v2186, 16
  %v2209 = vpop.permute.xlu0 %2208
  %2210 = vrot.lane.b32.xlu0 %v2187, 16
  %v2211 = vpop.permute.xlu0 %2210
  %v2212 = vsel %vm124, %v2209, %v2211
  %v2213 = vsel %vm124, %v2207, %v2209
  %v2214 = vsel %vm124, %v2205, %v2207
  %v2215 = vsel %vm124, %v2211, %v2205
  %v2216 = vmul.f32 %v2215, %v132
  %v2217 = vmul.f32 %v2214, %v136
  %v2218 = vmul.f32 %v2213, %v140
  %v2219 = vmul.f32 %v2212, %v144
  %2220 = vrot.lane.b32.xlu0 %v2184, 15
  %v2221 = vpop.permute.xlu0 %2220
  %2222 = vrot.lane.b32.xlu0 %v2185, 15
  %v2223 = vpop.permute.xlu0 %2222
  %2224 = vrot.lane.b32.xlu0 %v2186, 15
  %v2225 = vpop.permute.xlu0 %2224
  %2226 = vrot.lane.b32.xlu0 %v2187, 15
  %v2227 = vpop.permute.xlu0 %2226
  %v2228 = vsel %vm157, %v2225, %v2227
  %v2229 = vsel %vm157, %v2223, %v2225
  %v2230 = vsel %vm157, %v2221, %v2223
  %v2231 = vsel %vm157, %v2227, %v2221
  %v2232 = vmul.f32 %v2231, %v165
  %v2233 = vmul.f32 %v2230, %v169
  %v2234 = vmul.f32 %v2229, %v173
  %v2235 = vmul.f32 %v2228, %v177
  %2236 = vrot.lane.b32.xlu0 %v2184, 1
  %v2237 = vpop.permute.xlu0 %2236
  %2238 = vrot.lane.b32.xlu0 %v2185, 1
  %v2239 = vpop.permute.xlu0 %2238
  %2240 = vrot.lane.b32.xlu0 %v2186, 1
  %v2241 = vpop.permute.xlu0 %2240
  %2242 = vrot.lane.b32.xlu0 %v2187, 1
  %v2243 = vpop.permute.xlu0 %2242
  %v2244 = vsel %vm190, %v2241, %v2243
  %v2245 = vsel %vm190, %v2239, %v2241
  %v2246 = vsel %vm190, %v2237, %v2239
  %v2247 = vsel %vm190, %v2243, %v2237
  %v2248 = vmul.f32 %v2247, %v198
  %v2249 = vmul.f32 %v2246, %v202
  %v2250 = vmul.f32 %v2245, %v206
  %v2251 = vmul.f32 %v2244, %v210
  %2252 = vrot.lane.b32.xlu0 %v2184, 127
  %v2253 = vpop.permute.xlu0 %2252
  %2254 = vrot.lane.b32.xlu0 %v2185, 127
  %v2255 = vpop.permute.xlu0 %2254
  %2256 = vrot.lane.b32.xlu0 %v2186, 127
  %v2257 = vpop.permute.xlu0 %2256
  %2258 = vrot.lane.b32.xlu0 %v2187, 127
  %v2259 = vpop.permute.xlu0 %2258
  %v2260 = vsel %vm223, %v2257, %v2259
  %v2261 = vsel %vm223, %v2255, %v2257
  %v2262 = vsel %vm223, %v2253, %v2255
  %v2263 = vsel %vm223, %v2259, %v2253
  %v2264 = vmul.f32 %v2262, %v231
  %v2265 = vmul.f32 %v2261, %v235
  %v2266 = vmul.f32 %v2260, %v239
  %v2267 = vmul.f32 %v2263, %v243
  %2268 = vrot.lane.b32.xlu0 %v2184, 113
  %v2269 = vpop.permute.xlu0 %2268
  %2270 = vrot.lane.b32.xlu0 %v2185, 113
  %v2271 = vpop.permute.xlu0 %2270
  %2272 = vrot.lane.b32.xlu0 %v2186, 113
  %v2273 = vpop.permute.xlu0 %2272
  %2274 = vrot.lane.b32.xlu0 %v2187, 113
  %v2275 = vpop.permute.xlu0 %2274
  %v2276 = vsel %vm256, %v2273, %v2275
  %v2277 = vsel %vm256, %v2271, %v2273
  %v2278 = vsel %vm256, %v2269, %v2271
  %v2279 = vsel %vm256, %v2275, %v2269
  %v2280 = vmul.f32 %v2278, %v264
  %v2281 = vmul.f32 %v2277, %v268
  %v2282 = vmul.f32 %v2276, %v272
  %v2283 = vmul.f32 %v2279, %v276
  %2284 = vrot.lane.b32.xlu0 %v2184, 112
  %v2285 = vpop.permute.xlu0 %2284
  %2286 = vrot.lane.b32.xlu0 %v2185, 112
  %v2287 = vpop.permute.xlu0 %2286
  %2288 = vrot.lane.b32.xlu0 %v2186, 112
  %v2289 = vpop.permute.xlu0 %2288
  %2290 = vrot.lane.b32.xlu0 %v2187, 112
  %v2291 = vpop.permute.xlu0 %2290
  %v2292 = vsel %vm289, %v2289, %v2291
  %v2293 = vsel %vm289, %v2287, %v2289
  %v2294 = vsel %vm289, %v2285, %v2287
  %v2295 = vsel %vm289, %v2291, %v2285
  %v2296 = vmul.f32 %v2294, %v297
  %v2297 = vmul.f32 %v2293, %v301
  %v2298 = vmul.f32 %v2292, %v305
  %v2299 = vmul.f32 %v2295, %v309
  %2300 = vrot.lane.b32.xlu0 %v2184, 111
  %v2301 = vpop.permute.xlu0 %2300
  %2302 = vrot.lane.b32.xlu0 %v2185, 111
  %v2303 = vpop.permute.xlu0 %2302
  %2304 = vrot.lane.b32.xlu0 %v2186, 111
  %v2305 = vpop.permute.xlu0 %2304
  %2306 = vrot.lane.b32.xlu0 %v2187, 111
  %v2307 = vpop.permute.xlu0 %2306
  %v2308 = vsel %vm322, %v2305, %v2307
  %v2309 = vsel %vm322, %v2303, %v2305
  %v2310 = vsel %vm322, %v2301, %v2303
  %v2311 = vsel %vm322, %v2307, %v2301
  %v2312 = vmul.f32 %v2310, %v330
  %v2313 = vmul.f32 %v2309, %v334
  %v2314 = vmul.f32 %v2308, %v338
  %v2315 = vmul.f32 %v2311, %v342
  %v2316 = vpack.c.bf16 %v2216, %v2200
  %v2317 = vpack.c.bf16 %v2217, %v2201
  %v2318 = vpack.c.bf16 %v2218, %v2202
  %v2319 = vpack.c.bf16 %v2219, %v2203
  %v2320 = vpack.c.bf16 %v2248, %v2232
  %v2321 = vpack.c.bf16 %v2249, %v2233
  %v2322 = vpack.c.bf16 %v2250, %v2234
  %v2323 = vpack.c.bf16 %v2251, %v2235
  %v2324 = vpack.c.bf16 %v2264, %v2184
  %v2325 = vpack.c.bf16 %v2265, %v2185
  %v2326 = vpack.c.bf16 %v2266, %v2186
  %v2327 = vpack.c.bf16 %v2267, %v2187
  %v2328 = vpack.c.bf16 %v2296, %v2280
  %v2329 = vpack.c.bf16 %v2297, %v2281
  %v2330 = vpack.c.bf16 %v2298, %v2282
  %v2331 = vpack.c.bf16 %v2299, %v2283
  %v2332 = vpack.c.bf16 %v2312, %v2312
  %v2333 = vpack.c.bf16 %v2313, %v2313
  %v2334 = vpack.c.bf16 %v2314, %v2314
  %v2335 = vpack.c.bf16 %v2315, %v2315
  %v2336 = vld [vmem:[%s13] sm:$0xf]
  %v2337 = vld [vmem:[%s14] sm:$0xff]
  %2339 = vset.pattern.permute.xlu0 0
  %2340 = vperm.xlu0 %2339, %v2337
  %v2341 = vpop.permute.xlu0 %2340
  %v2344 = vsel %vm374, %v2336, 0
  %v2347 = vsel %vm378, %v2332, 0
  %v2350 = vsel %vm378, %v2333, 0
  %v2353 = vsel %vm378, %v2334, 0
  %v2356 = vsel %vm378, %v2335, 0
  %2358 = vmatprep.subr.bf16.mxu0 %v2317
  %2359 = vmatpush1.bf16.msra.mxu0 %v2316
  %2360 = vmatprep.subr.bf16.mxu0 %v2321
  %2361 = vmatpush1.bf16.msra.mxu0 %v2320
  %2362 = vmatprep.subr.bf16.mxu0 %v2325
  %2363 = vmatpush1.bf16.msra.mxu0 %v2324
  %2364 = vmatprep.subr.bf16.mxu0 %v2329
  %2365 = vmatpush1.bf16.msra.mxu0 %v2328
  %2366 = vmatprep.subr.bf16.mxu0 %v2350
  %2367 = vmatpush1.bf16.msra.mxu0 %v2347
  %2368 = vmatprep.subr.bf16.mxu0 0
  %2369 = vmatpush1.bf16.msra.mxu0 0
  %2370 = vmatprep.subr.bf16.mxu0 0
  %2371 = vmatpush1.bf16.msra.mxu0 0
  %2372 = vmatprep.subr.bf16.mxu0 0
  %2373 = vmatpush1.bf16.msra.mxu0 0
  %2374 = vmatprep.subr.bf16.mxu0 0
  %2375 = vmatpush1.bf16.msra.mxu0 0
  %2376 = vmatprep.subr.bf16.mxu0 0
  %2377 = vmatpush1.bf16.msra.mxu0 0
  %2378 = vmatprep.subr.bf16.mxu0 0
  %2379 = vmatpush1.bf16.msra.mxu0 0
  %2380 = vmatprep.subr.bf16.mxu0 0
  %2381 = vmatpush1.bf16.msra.mxu0 0
  %2382 = vmatprep.subr.bf16.mxu0 0
  %2383 = vmatpush1.bf16.msra.mxu0 0
  %2384 = vmatprep.subr.bf16.mxu0 0
  %2385 = vmatpush1.bf16.msra.mxu0 0
  %2386 = vmatprep.subr.bf16.mxu0 0
  %2387 = vmatpush1.bf16.msra.mxu0 0
  %2388 = vmatprep.subr.bf16.mxu0 0
  %2389 = vmatpush1.bf16.msra.mxu0 0
  %2390 = vmatprep.mubr.bf16.mxu0 0
  %2391 = vmatmul.mubr.bf16.gmra.mrb[0].mxu0 %v2344
  %v2392 = vpop.f32.mrb[0].mxu0
  %v2393 = vadd.f32 %v2341, %v2392
  %v2394 = vpop.f32.mrb[0].mxu0
  %v2395 = vadd.f32 %v2341, %v2394
  %v2396 = vpop.f32.mrb[0].mxu0
  %v2397 = vpop.f32.mrb[0].mxu0
  %2398 = vdwg.mxu0
  %2399 = vmatprep.subr.bf16.mxu0 %v2319
  %2400 = vmatpush1.bf16.msra.mxu0 %v2318
  %2401 = vmatprep.subr.bf16.mxu0 %v2323
  %2402 = vmatpush1.bf16.msra.mxu0 %v2322
  %2403 = vmatprep.subr.bf16.mxu0 %v2327
  %2404 = vmatpush1.bf16.msra.mxu0 %v2326
  %2405 = vmatprep.subr.bf16.mxu0 %v2331
  %2406 = vmatpush1.bf16.msra.mxu0 %v2330
  %2407 = vmatprep.subr.bf16.mxu0 %v2356
  %2408 = vmatpush1.bf16.msra.mxu0 %v2353
  %2409 = vmatprep.subr.bf16.mxu0 0
  %2410 = vmatpush1.bf16.msra.mxu0 0
  %2411 = vmatprep.subr.bf16.mxu0 0
  %2412 = vmatpush1.bf16.msra.mxu0 0
  %2413 = vmatprep.subr.bf16.mxu0 0
  %2414 = vmatpush1.bf16.msra.mxu0 0
  %2415 = vmatprep.subr.bf16.mxu0 0
  %2416 = vmatpush1.bf16.msra.mxu0 0
  %2417 = vmatprep.subr.bf16.mxu0 0
  %2418 = vmatpush1.bf16.msra.mxu0 0
  %2419 = vmatprep.subr.bf16.mxu0 0
  %2420 = vmatpush1.bf16.msra.mxu0 0
  %2421 = vmatprep.subr.bf16.mxu0 0
  %2422 = vmatpush1.bf16.msra.mxu0 0
  %2423 = vmatprep.subr.bf16.mxu0 0
  %2424 = vmatpush1.bf16.msra.mxu0 0
  %2425 = vmatprep.subr.bf16.mxu0 0
  %2426 = vmatpush1.bf16.msra.mxu0 0
  %2427 = vmatprep.subr.bf16.mxu0 0
  %2428 = vmatpush1.bf16.msra.mxu0 0
  %2429 = vmatprep.subr.bf16.mxu0 0
  %2430 = vmatpush1.bf16.msra.mxu0 0
  %2431 = vmatprep.mubr.bf16.mxu0 0
  %2432 = vmatmul.mubr.bf16.gmra.mrb[0].mxu0 %v2344
  %v2433 = vpop.f32.mrb[0].mxu0
  %v2434 = vadd.f32 %v2341, %v2433
  %v2435 = vpop.f32.mrb[0].mxu0
  %v2436 = vadd.f32 %v2341, %v2435
  %v2437 = vpop.f32.mrb[0].mxu0
  %v2438 = vpop.f32.mrb[0].mxu0
  %2439 = vdwg.mxu0
  %2440 = vst [vmem:[%s21] sm:$0xff] %v2393
  %2441 = vst [vmem:[%s21 + $0x8] sm:$0xff] %v2395
  %2442 = vst [vmem:[%s21 + $0x10] sm:$0xff] %v2434
  %2443 = vst [vmem:[%s21 + $0x18] sm:$0xff] %v2436
  // Predicated region
  $region86: #{unet_forward.1} parent=0 // pred_check
    _
  $region87: #{unet_forward.1} parent=0 // pred_check_branch
    %2445 = sbr.rel (0) target = $region89
  $region88: #{unet_forward.1} parent=0 // pred_region
    _
  $region89: #{unet_forward.1} parent=0 // pred_fallthru
    _
  // Predicated region
  $region90: #{unet_forward.1} parent=0 // pred_check
    _
  $region91: #{unet_forward.1} parent=0 // pred_check_branch
    %2447 = sbr.rel (0) target = $region93
  $region92: #{unet_forward.1} parent=0 // pred_region
    _
  $region93: #{unet_forward.1} parent=0 // pred_fallthru
    _

</llo_original>
